<compile_context>
chip_gen: v7x
topology: tpu7x:2x2x1
jax: 0.10.0
libtpu: 0.0.40
codegen_flags: <defaults>
</compile_context>

<pallas_src>
import functools

import jax
import jax.numpy as jnp
from jax.experimental import pallas as pl
from jax.experimental.pallas import tpu as pltpu

# ---- model hyperparameters (from the PyTorch source) ----
N_EMBD = 32
BLOCK_SIZE = 8                         # sequence length T
N_HEAD = 4                             # num_heads
HEAD_DIM = N_EMBD // N_HEAD            # 8: runnable per-head output dim
ATTN_SCALE = float(N_EMBD) ** (-0.5)   # quirk: module-level head_size == n_embd
MASK_NEG = -1e30                       # additive causal bias; exp() underflows to 0


def _mha_kernel(x_ref, wqkv_ref, wp_ref, bp_ref, o_ref, *, mm_dtype):
    T, C, H, D = BLOCK_SIZE, N_EMBD, N_HEAD, HEAD_DIM
    BB = x_ref.shape[0]
    N = BB * T

    # (BB, T, C) -> (N, C): leading-dim merge, layout preserving (free).
    xs = x_ref[...].reshape(N, C)

    # Fused q|k|v projection: one (N, C) @ (C, 3C) MXU matmul.  ATTN_SCALE is
    # pre-folded into the q columns (wrapper), so no score-scaling pass.
    qkv = jnp.dot(xs.astype(mm_dtype), wqkv_ref[...].astype(mm_dtype),
                  preferred_element_type=jnp.float32)              # (N, 3C) f32

    # Move the head dim from lanes to the single *leading* batch dim once, so
    # the scores / softmax / PV run as one batched op set over all heads
    # (instead of a 4x-unrolled per-head loop).
    def heads(off):
        cols = [qkv[:, off + h * D: off + (h + 1) * D] for h in range(H)]
        # (H, N, D) -> (H*BB, T, D): leading split/merge only (T == sublane
        # tile), layout preserving.
        return jnp.stack(cols, axis=0).reshape(H * BB, T, D)

    q = heads(0)          # (H*BB, T, D), already scaled by ATTN_SCALE via Wq
    k = heads(C)
    v = heads(2 * C)

    # Additive causal bias, built once per grid step and broadcast.
    row = jax.lax.broadcasted_iota(jnp.int32, (T, T), 0)
    col = jax.lax.broadcasted_iota(jnp.int32, (T, T), 1)
    bias = jnp.where(row >= col, 0.0, MASK_NEG).astype(jnp.float32)  # (T, T)

    # Batched (over head*row-block) attention scores + numerically stable
    # softmax.  Statistics stay in f32 on every chip generation.
    s = jnp.einsum("bqd,bkd->bqk", q.astype(mm_dtype), k.astype(mm_dtype),
                   preferred_element_type=jnp.float32)              # (H*BB, T, T)
    s = s + bias
    m = jnp.max(s, axis=-1, keepdims=True)
    p = jnp.exp(s - m)
    p = p * pl.reciprocal(jnp.sum(p, axis=-1, keepdims=True), approx=True)

    pv = jnp.einsum("bqk,bkd->bqd", p.astype(mm_dtype), v.astype(mm_dtype),
                    preferred_element_type=jnp.float32)             # (H*BB, T, D)

    # Heads back to lanes: (H*BB, T, D) -> (H, N, D) (free) -> lane concat to
    # (N, C), then ONE (N, 32) @ (32, 32) output projection + bias.
    pv = pv.reshape(H, N, D)
    att = jnp.concatenate([pv[h] for h in range(H)], axis=-1)       # (N, C)
    out = jnp.dot(att.astype(mm_dtype), wp_ref[...].astype(mm_dtype),
                  preferred_element_type=jnp.float32) + bp_ref[...]

    # dropout = identity (eval mode)
    o_ref[...] = out.reshape(BB, T, C).astype(o_ref.dtype)


def multi_head_attention(x, params, *, batch_block=512,
                         compute_dtype=jnp.float32):
    """MultiHeadedAttention forward (eval mode).

    x: (B, T, C).  params: wq/wk/wv/wp oriented (in, out), bp (1, C).
    compute_dtype: MXU-operand dtype; jnp.bfloat16 is a further win on
    v6e/v7x (softmax stats stay f32).  Keep f32 on v5e.
    """
    B, T, C = x.shape
    assert T == BLOCK_SIZE and C == N_EMBD

    # Fold the (module-level head_size) score scale into Wq and fuse q|k|v
    # into a single (C, 3C) operand -- once, outside the kernel.
    wqkv = jnp.concatenate(
        [params["wq"] * ATTN_SCALE, params["wk"], params["wv"]], axis=1)

    # Batch-block selection:
    #  * as large as possible (amortize ~0.35 us/step pipeline overhead),
    #  * capped at ceil(B/2) (rounded up to a sublane multiple) when B allows
    #    so the "parallel" grid axis has >= 2 steps -> both v7x TensorCores
    #    get work (no effect on 1-TC v5e/v6e),
    #  * no zero-padded copy of x: ragged tail handled by partial-block
    #    masking via a cdiv grid.
    bb = min(batch_block, B)
    if B >= 16:
        half = -(-B // 2)
        half = -(-half // 8) * 8
        bb = min(bb, half)
    if bb < B:
        bb = max(8, (bb // 8) * 8)      # sublane-aligned blocks
    grid = pl.cdiv(B, bb)

    kernel = functools.partial(_mha_kernel, mm_dtype=compute_dtype)

    out = pl.pallas_call(
        kernel,
        out_shape=jax.ShapeDtypeStruct((B, T, C), x.dtype),
        grid_spec=pltpu.PrefetchScalarGridSpec(
            num_scalar_prefetch=0,
            grid=(grid,),
            in_specs=[
                pl.BlockSpec((bb, T, C), lambda i: (i, 0, 0)),   # batch-row block
                pl.BlockSpec((C, 3 * C), lambda i: (0, 0)),      # fused Wqkv (q pre-scaled)
                pl.BlockSpec((C, C), lambda i: (0, 0)),          # Wp
                pl.BlockSpec((1, C), lambda i: (0, 0)),          # proj bias
            ],
            out_specs=pl.BlockSpec((bb, T, C), lambda i: (i, 0, 0)),
        ),
        compiler_params=pltpu.CompilerParams(
            dimension_semantics=("parallel",),
            # Explicit cap with headroom: ~9 MiB actually used at bb=512,
            # stays below v7x's 64 MiB physical VMEM even for larger blocks.
            vmem_limit_bytes=48 * 1024 * 1024,
        ),
    )(x, wqkv, params["wp"], params["bp"])
    return out


def reference_mha(x, p):
    """Pure-JAX reference of the same forward pass (eval-mode dropout)."""
    B, T, C = x.shape
    q = x @ p["wq"]
    k = x @ p["wk"]
    v = x @ p["wv"]
    qh = q.reshape(B, T, N_HEAD, HEAD_DIM)
    kh = k.reshape(B, T, N_HEAD, HEAD_DIM)
    vh = v.reshape(B, T, N_HEAD, HEAD_DIM)
    s = jnp.einsum("bthd,bshd->bhts", qh, kh) * ATTN_SCALE
    mask = jnp.tril(jnp.ones((T, T), bool))
    s = jnp.where(mask[None, None], s, -jnp.inf)
    w = jax.nn.softmax(s, axis=-1)
    att = jnp.einsum("bhts,bshd->bthd", w, vh).reshape(B, T, C)
    return att @ p["wp"] + p["bp"]


def init_params(key):
    ks = jax.random.split(key, 5)
    scale = 0.1
    return {
        # per-head q/k/v weights stacked along output columns -> (C, C)
        "wq": scale * jax.random.normal(ks[0], (N_EMBD, N_EMBD), jnp.float32),
        "wk": scale * jax.random.normal(ks[1], (N_EMBD, N_EMBD), jnp.float32),
        "wv": scale * jax.random.normal(ks[2], (N_EMBD, N_EMBD), jnp.float32),
        "wp": scale * jax.random.normal(ks[3], (N_EMBD, N_EMBD), jnp.float32),
        "bp": scale * jax.random.normal(ks[4], (1, N_EMBD), jnp.float32),
    }


if __name__ == "__main__":
    key = jax.random.PRNGKey(0)
    kx, kp = jax.random.split(key)
    B = 2
    x = jax.random.normal(kx, (B, BLOCK_SIZE, N_EMBD), jnp.float32)
    params = init_params(kp)

    out = multi_head_attention(x, params)
    out = jax.block_until_ready(out)

    ref = reference_mha(x, params)
    assert out.shape == (B, BLOCK_SIZE, N_EMBD)
    # tolerance slightly looser than 1e-4 because the softmax denominator uses
    # the EUP approximate reciprocal (relative error ~2^-12)
    assert jnp.allclose(out, ref, atol=1e-3, rtol=1e-3), "mismatch vs pure-JAX reference"

    print("KERNEL_OK")
</pallas_src>

<mosaic_0001>
module attributes {stable_mosaic.version = 11 : i64} {
  func.func @_mha_kernel(%arg0: i32, %arg1: memref<2x8x32xf32, #tpu.memory_space<vmem>>, %arg2: memref<32x96xf32, #tpu.memory_space<vmem>>, %arg3: memref<32x32xf32, #tpu.memory_space<vmem>>, %arg4: memref<1x32xf32, #tpu.memory_space<vmem>>, %arg5: memref<2x8x32xf32, #tpu.memory_space<vmem>>) attributes {dimension_semantics = [#tpu.dimension_semantics<parallel>], iteration_bounds = array<i64: 1>, scalar_prefetch = 0 : i64, scratch_operands = 0 : i64, tpu.core_type = #tpu.core_type<tc>, window_params = [{transform_indices = @transform_0, window_bounds = array<i64: 2, 8, 32>}, {pipeline_mode = #tpu.pipeline_mode<synchronous>, transform_indices = @transform_1, window_bounds = array<i64: 32, 96>}, {pipeline_mode = #tpu.pipeline_mode<synchronous>, transform_indices = @transform_2, window_bounds = array<i64: 32, 32>}, {pipeline_mode = #tpu.pipeline_mode<synchronous>, transform_indices = @transform_3, window_bounds = array<i64: 1, 32>}, {transform_indices = @transform_4, window_bounds = array<i64: 2, 8, 32>}]} {
    %c0 = arith.constant 0 : index
    %c0_0 = arith.constant 0 : index
    %c0_1 = arith.constant 0 : index
    %0 = vector.load %arg1[%c0, %c0_0, %c0_1] : memref<2x8x32xf32, #tpu.memory_space<vmem>>, vector<2x8x32xf32>
    %1 = vector.shape_cast %0 : vector<2x8x32xf32> to vector<16x32xf32>
    %c0_2 = arith.constant 0 : index
    %c0_3 = arith.constant 0 : index
    %2 = vector.load %arg2[%c0_2, %c0_3] : memref<32x96xf32, #tpu.memory_space<vmem>>, vector<32x96xf32>
    %cst = arith.constant dense<0.000000e+00> : vector<16x96xf32>
    %3 = tpu.matmul %1, %2, %cst {dimension_numbers = #tpu.dot_dimension_numbers<[1], [0], [0], [1], [0, 0, 1, 1], [], []>} : vector<16x32xf32>, vector<32x96xf32>, vector<16x96xf32> -> vector<16x96xf32>
    %4 = vector.extract_strided_slice %3 {offsets = [0, 0], sizes = [16, 8], strides = [1, 1]} : vector<16x96xf32> to vector<16x8xf32>
    %5 = vector.extract_strided_slice %3 {offsets = [0, 8], sizes = [16, 8], strides = [1, 1]} : vector<16x96xf32> to vector<16x8xf32>
    %6 = vector.extract_strided_slice %3 {offsets = [0, 16], sizes = [16, 8], strides = [1, 1]} : vector<16x96xf32> to vector<16x8xf32>
    %7 = vector.extract_strided_slice %3 {offsets = [0, 24], sizes = [16, 8], strides = [1, 1]} : vector<16x96xf32> to vector<16x8xf32>
    %8 = vector.shape_cast %4 : vector<16x8xf32> to vector<1x16x8xf32>
    %9 = vector.shape_cast %5 : vector<16x8xf32> to vector<1x16x8xf32>
    %10 = vector.shape_cast %6 : vector<16x8xf32> to vector<1x16x8xf32>
    %11 = vector.shape_cast %7 : vector<16x8xf32> to vector<1x16x8xf32>
    %12 = tpu.concatenate %8, %9, %10, %11 in 0 : vector<1x16x8xf32>, vector<1x16x8xf32>, vector<1x16x8xf32>, vector<1x16x8xf32> -> vector<4x16x8xf32>
    %13 = vector.shape_cast %12 : vector<4x16x8xf32> to vector<8x8x8xf32>
    %14 = vector.extract_strided_slice %3 {offsets = [0, 32], sizes = [16, 8], strides = [1, 1]} : vector<16x96xf32> to vector<16x8xf32>
    %15 = vector.extract_strided_slice %3 {offsets = [0, 40], sizes = [16, 8], strides = [1, 1]} : vector<16x96xf32> to vector<16x8xf32>
    %16 = vector.extract_strided_slice %3 {offsets = [0, 48], sizes = [16, 8], strides = [1, 1]} : vector<16x96xf32> to vector<16x8xf32>
    %17 = vector.extract_strided_slice %3 {offsets = [0, 56], sizes = [16, 8], strides = [1, 1]} : vector<16x96xf32> to vector<16x8xf32>
    %18 = vector.shape_cast %14 : vector<16x8xf32> to vector<1x16x8xf32>
    %19 = vector.shape_cast %15 : vector<16x8xf32> to vector<1x16x8xf32>
    %20 = vector.shape_cast %16 : vector<16x8xf32> to vector<1x16x8xf32>
    %21 = vector.shape_cast %17 : vector<16x8xf32> to vector<1x16x8xf32>
    %22 = tpu.concatenate %18, %19, %20, %21 in 0 : vector<1x16x8xf32>, vector<1x16x8xf32>, vector<1x16x8xf32>, vector<1x16x8xf32> -> vector<4x16x8xf32>
    %23 = vector.shape_cast %22 : vector<4x16x8xf32> to vector<8x8x8xf32>
    %24 = vector.extract_strided_slice %3 {offsets = [0, 64], sizes = [16, 8], strides = [1, 1]} : vector<16x96xf32> to vector<16x8xf32>
    %25 = vector.extract_strided_slice %3 {offsets = [0, 72], sizes = [16, 8], strides = [1, 1]} : vector<16x96xf32> to vector<16x8xf32>
    %26 = vector.extract_strided_slice %3 {offsets = [0, 80], sizes = [16, 8], strides = [1, 1]} : vector<16x96xf32> to vector<16x8xf32>
    %27 = vector.extract_strided_slice %3 {offsets = [0, 88], sizes = [16, 8], strides = [1, 1]} : vector<16x96xf32> to vector<16x8xf32>
    %28 = vector.shape_cast %24 : vector<16x8xf32> to vector<1x16x8xf32>
    %29 = vector.shape_cast %25 : vector<16x8xf32> to vector<1x16x8xf32>
    %30 = vector.shape_cast %26 : vector<16x8xf32> to vector<1x16x8xf32>
    %31 = vector.shape_cast %27 : vector<16x8xf32> to vector<1x16x8xf32>
    %32 = tpu.concatenate %28, %29, %30, %31 in 0 : vector<1x16x8xf32>, vector<1x16x8xf32>, vector<1x16x8xf32>, vector<1x16x8xf32> -> vector<4x16x8xf32>
    %33 = vector.shape_cast %32 : vector<4x16x8xf32> to vector<8x8x8xf32>
    %34 = tpu.iota {dimensions = array<i32: 0>} : vector<8x8xi32>
    %35 = tpu.iota {dimensions = array<i32: 1>} : vector<8x8xi32>
    %36 = arith.cmpi sge, %34, %35 : vector<8x8xi32>
    %cst_4 = arith.constant 0.000000e+00 : f32
    %cst_5 = arith.constant -1.000000e+30 : f32
    %37 = vector.broadcast %cst_4 : f32 to vector<8x8xf32>
    %38 = vector.broadcast %cst_5 : f32 to vector<8x8xf32>
    %39 = arith.select %36, %37, %38 : vector<8x8xi1>, vector<8x8xf32>
    "tpu.trace_start"() <{level = 10 : i32, message = "bqd,bkd->bqk"}> : () -> ()
    %cst_6 = arith.constant dense<0.000000e+00> : vector<8x8x8xf32>
    %40 = tpu.matmul %13, %23, %cst_6 {dimension_numbers = #tpu.dot_dimension_numbers<[2], [2], [1], [1], [0, 0, 0, 1, 1, 1], [0], [0]>} : vector<8x8x8xf32>, vector<8x8x8xf32>, vector<8x8x8xf32> -> vector<8x8x8xf32>
    "tpu.trace_stop"() : () -> ()
    %41 = vector.shape_cast %39 : vector<8x8xf32> to vector<1x8x8xf32>
    %42 = vector.broadcast %41 : vector<1x8x8xf32> to vector<8x8x8xf32>
    %43 = arith.addf %40, %42 : vector<8x8x8xf32>
    %cst_7 = arith.constant dense<0xFF800000> : vector<8x8xf32>
    %44 = vector.multi_reduction <maximumf>, %43, %cst_7 [2] : vector<8x8x8xf32> to vector<8x8xf32>
    %45 = vector.shape_cast %44 : vector<8x8xf32> to vector<8x8x1xf32>
    %46 = vector.broadcast %45 : vector<8x8x1xf32> to vector<8x8x8xf32>
    %47 = arith.subf %43, %46 : vector<8x8x8xf32>
    %48 = math.exp %47 : vector<8x8x8xf32>
    %cst_8 = arith.constant dense<0.000000e+00> : vector<8x8xf32>
    %49 = vector.multi_reduction <add>, %48, %cst_8 [2] : vector<8x8x8xf32> to vector<8x8xf32>
    %50 = vector.shape_cast %49 : vector<8x8xf32> to vector<8x8x1xf32>
    %51 = tpu.reciprocal %50 {approx = true} : vector<8x8x1xf32> -> vector<8x8x1xf32>
    %52 = vector.broadcast %51 : vector<8x8x1xf32> to vector<8x8x8xf32>
    %53 = arith.mulf %48, %52 : vector<8x8x8xf32>
    "tpu.trace_start"() <{level = 10 : i32, message = "bqk,bkd->bqd"}> : () -> ()
    %cst_9 = arith.constant dense<0.000000e+00> : vector<8x8x8xf32>
    %54 = tpu.matmul %53, %33, %cst_9 {dimension_numbers = #tpu.dot_dimension_numbers<[2], [1], [1], [2], [0, 0, 0, 1, 1, 2], [0], [0]>} : vector<8x8x8xf32>, vector<8x8x8xf32>, vector<8x8x8xf32> -> vector<8x8x8xf32>
    "tpu.trace_stop"() : () -> ()
    %55 = vector.shape_cast %54 : vector<8x8x8xf32> to vector<4x16x8xf32>
    %56 = vector.extract_strided_slice %55 {offsets = [0, 0, 0], sizes = [1, 16, 8], strides = [1, 1, 1]} : vector<4x16x8xf32> to vector<1x16x8xf32>
    %57 = vector.shape_cast %56 : vector<1x16x8xf32> to vector<16x8xf32>
    %58 = vector.extract_strided_slice %55 {offsets = [1, 0, 0], sizes = [1, 16, 8], strides = [1, 1, 1]} : vector<4x16x8xf32> to vector<1x16x8xf32>
    %59 = vector.shape_cast %58 : vector<1x16x8xf32> to vector<16x8xf32>
    %60 = vector.extract_strided_slice %55 {offsets = [2, 0, 0], sizes = [1, 16, 8], strides = [1, 1, 1]} : vector<4x16x8xf32> to vector<1x16x8xf32>
    %61 = vector.shape_cast %60 : vector<1x16x8xf32> to vector<16x8xf32>
    %62 = vector.extract_strided_slice %55 {offsets = [3, 0, 0], sizes = [1, 16, 8], strides = [1, 1, 1]} : vector<4x16x8xf32> to vector<1x16x8xf32>
    %63 = vector.shape_cast %62 : vector<1x16x8xf32> to vector<16x8xf32>
    %64 = tpu.concatenate %57, %59, %61, %63 in 1 : vector<16x8xf32>, vector<16x8xf32>, vector<16x8xf32>, vector<16x8xf32> -> vector<16x32xf32>
    %c0_10 = arith.constant 0 : index
    %c0_11 = arith.constant 0 : index
    %65 = vector.load %arg3[%c0_10, %c0_11] : memref<32x32xf32, #tpu.memory_space<vmem>>, vector<32x32xf32>
    %cst_12 = arith.constant dense<0.000000e+00> : vector<16x32xf32>
    %66 = tpu.matmul %64, %65, %cst_12 {dimension_numbers = #tpu.dot_dimension_numbers<[1], [0], [0], [1], [0, 0, 1, 1], [], []>} : vector<16x32xf32>, vector<32x32xf32>, vector<16x32xf32> -> vector<16x32xf32>
    %c0_13 = arith.constant 0 : index
    %c0_14 = arith.constant 0 : index
    %67 = vector.load %arg4[%c0_13, %c0_14] : memref<1x32xf32, #tpu.memory_space<vmem>>, vector<1x32xf32>
    %68 = vector.broadcast %67 : vector<1x32xf32> to vector<16x32xf32>
    %69 = arith.addf %66, %68 : vector<16x32xf32>
    %70 = vector.shape_cast %69 : vector<16x32xf32> to vector<2x8x32xf32>
    %c0_15 = arith.constant 0 : index
    %c0_16 = arith.constant 0 : index
    %c0_17 = arith.constant 0 : index
    %71 = vector.load %arg5[%c0_15, %c0_16, %c0_17] : memref<2x8x32xf32, #tpu.memory_space<vmem>>, vector<2x8x32xf32>
    tpu.vector_store %arg5[%c0_15, %c0_16, %c0_17], %70 {strides = array<i32>} : memref<2x8x32xf32, #tpu.memory_space<vmem>>, vector<2x8x32xf32>,
    return
  }
  func.func @transform_0(%arg0: i32) -> (i32, i32, i32) {
    %c0_i32 = arith.constant 0 : i32
    %c0_i32_0 = arith.constant 0 : i32
    %c0_i32_1 = arith.constant 0 : i32
    return %arg0, %c0_i32, %c0_i32_0 : i32, i32, i32
  }
  func.func @transform_1(%arg0: i32) -> (i32, i32) {
    %c0_i32 = arith.constant 0 : i32
    %c0_i32_0 = arith.constant 0 : i32
    %c0_i32_1 = arith.constant 0 : i32
    return %c0_i32, %c0_i32_0 : i32, i32
  }
  func.func @transform_2(%arg0: i32) -> (i32, i32) {
    %c0_i32 = arith.constant 0 : i32
    %c0_i32_0 = arith.constant 0 : i32
    %c0_i32_1 = arith.constant 0 : i32
    return %c0_i32, %c0_i32_0 : i32, i32
  }
  func.func @transform_3(%arg0: i32) -> (i32, i32) {
    %c0_i32 = arith.constant 0 : i32
    %c0_i32_0 = arith.constant 0 : i32
    %c0_i32_1 = arith.constant 0 : i32
    return %c0_i32, %c0_i32_0 : i32, i32
  }
  func.func @transform_4(%arg0: i32) -> (i32, i32, i32) {
    %c0_i32 = arith.constant 0 : i32
    %c0_i32_0 = arith.constant 0 : i32
    %c0_i32_1 = arith.constant 0 : i32
    return %arg0, %c0_i32, %c0_i32_0 : i32, i32, i32
  }
}

</mosaic_0001>

<llo_original>
// kernel: tpu_custom_call.1
$region0: #{tpu_custom_call.1}
  #allocation0 [shape = 'u32[]', space=smem, size = 0x4, offset = 0x4, fixed_abs, tag = 'smem constant byte address 0x4 - core index']
  #allocation1 [shape = 'u32[144,128]{1,0:T(1,128)}', space=vmem, size = 0x12000, scoped, tag = 'internal scratch']
  %s0 = inlined_call_operand.hbm [shape: f32[2,8,32], index: 0, kind: input, shape index: {}]
  %s1 = inlined_call_operand.hbm [shape: f32[32,96], index: 1, kind: input, shape index: {}]
  %s2 = inlined_call_operand.hbm [shape: f32[32,32], index: 2, kind: input, shape index: {}]
  %s3 = inlined_call_operand.vmem [shape: f32[1,32], index: 3, kind: input, shape index: {}]
  %s4 = inlined_call_operand.hbm [shape: f32[2,8,32], index: 4, kind: output, shape index: {}]
  %s5 = sld [smem:[#allocation0]]
  $region38: #{tpu_custom_call.1} parent=0
    _
  %s7 = ssub.s32 1, %s5
  %s8 = scalar_select 0, %s7, %s5
  $region1: #{tpu_custom_call.1} parent=0
    #allocation2 [shape = 'u8[8192]{0}', space=vmem, size = 0x2000, scoped, tag = 'input window, operand 0, single buffered']
    #allocation3 [shape = 's32[1]{0}', space=sflag, size = 0x4, scoped, tag = 'scoped memory for tpu_custom_call.1']
    #allocation4 [shape = 's32[1]{0}', space=sflag, size = 0x4, scoped, tag = 'scoped memory for tpu_custom_call.1']
    #allocation5 [shape = 'u8[16384]{0}', space=vmem, size = 0x4000, scoped, tag = 'input window, operand 1, single buffered']
    #allocation6 [shape = 's32[1]{0}', space=sflag, size = 0x4, scoped, tag = 'scoped memory for tpu_custom_call.1']
    #allocation7 [shape = 'u8[16384]{0}', space=vmem, size = 0x4000, scoped, tag = 'input window, operand 2, single buffered']
    #allocation8 [shape = 'u8[8192]{0}', space=vmem, size = 0x2000, scoped, tag = 'output window, operand 0, single buffered']
    %9 = vsyncpa [#allocation3], 0
    %10 = vsyncpa [#allocation6], 0
    %11 = vsyncpa [#allocation4], 0
    // Predicated region
    $region2: #{tpu_custom_call.1} parent=1 // pred_check
      _
    $region3: #{tpu_custom_call.1} parent=1 // pred_check_branch
      %13 = sbr.rel (0) target = $region5
    $region4: #{tpu_custom_call.1} parent=1 // pred_region
      %s15 = ssub.s32 256, 256
      %16 = vsyncadd [#allocation3], %s15
      %s17 = sshll.u32 [#allocation2], 4
      %s18 = int_to_ptr.vmem [resolvable:$true] %s17
      %23 = dma.hbm_to_vmem [thread:$0]  %s0, 256, %s18, [#allocation3], 128, 128, 8
    $region5: #{tpu_custom_call.1} parent=1 // pred_fallthru
      _
    // Predicated region
    $region6: #{tpu_custom_call.1} parent=1 // pred_check
      _
    $region7: #{tpu_custom_call.1} parent=1 // pred_check_branch
      %25 = sbr.rel (0) target = $region9
    $region8: #{tpu_custom_call.1} parent=1 // pred_region
      %s27 = ssub.s32 512, 512
      %28 = vsyncadd [#allocation6], %s27
      %s29 = sshll.u32 [#allocation5], 4
      %s30 = int_to_ptr.vmem [resolvable:$true] %s29
      %35 = dma.hbm_to_vmem [thread:$0]  %s1, 512, %s30, [#allocation6], 128, 128, 8
    $region9: #{tpu_custom_call.1} parent=1 // pred_fallthru
      _
    // Predicated region
    $region10: #{tpu_custom_call.1} parent=1 // pred_check
      _
    $region11: #{tpu_custom_call.1} parent=1 // pred_check_branch
      %37 = sbr.rel (0) target = $region13
    $region12: #{tpu_custom_call.1} parent=1 // pred_region
      %s39 = ssub.s32 512, 512
      %40 = vsyncadd [#allocation6], %s39
      %s41 = sshll.u32 [#allocation7], 4
      %s42 = int_to_ptr.vmem [resolvable:$true] %s41
      %47 = dma.hbm_to_vmem [thread:$0]  %s2, 512, %s42, [#allocation6], 128, 128, 8
    $region13: #{tpu_custom_call.1} parent=1 // pred_fallthru
      _
    // Predicated region
    $region14: #{tpu_custom_call.1} parent=1 // pred_check
      _
    $region15: #{tpu_custom_call.1} parent=1 // pred_check_branch
      %49 = sbr.rel (0) target = $region17
    $region16: #{tpu_custom_call.1} parent=1 // pred_region
      _
    $region17: #{tpu_custom_call.1} parent=1 // pred_fallthru
      _
    // Predicated region
    $region18: #{tpu_custom_call.1} parent=1 // pred_check
      _
    $region19: #{tpu_custom_call.1} parent=1 // pred_check_branch
      %51 = sbr.rel (0) target = $region21
    $region20: #{tpu_custom_call.1} parent=1 // pred_region
      %52 = dma.done [#allocation3], 256
    $region21: #{tpu_custom_call.1} parent=1 // pred_fallthru
      _
    // Predicated region
    $region22: #{tpu_custom_call.1} parent=1 // pred_check
      _
    $region23: #{tpu_custom_call.1} parent=1 // pred_check_branch
      %54 = sbr.rel (0) target = $region25
    $region24: #{tpu_custom_call.1} parent=1 // pred_region
      %55 = dma.done [#allocation6], 512
    $region25: #{tpu_custom_call.1} parent=1 // pred_fallthru
      _
    // Predicated region
    $region26: #{tpu_custom_call.1} parent=1 // pred_check
      _
    $region27: #{tpu_custom_call.1} parent=1 // pred_check_branch
      %57 = sbr.rel (0) target = $region29
    $region28: #{tpu_custom_call.1} parent=1 // pred_region
      %58 = dma.done [#allocation6], 512
    $region29: #{tpu_custom_call.1} parent=1 // pred_fallthru
      _
    %v59 = vld [vmem:[#allocation2] sm:$0xff]
    %v60 = vld [vmem:[#allocation2 + $0x8] sm:$0xff]
    %v61 = vld [vmem:[#allocation5] sm:$0xff]
    %v62 = vld [vmem:[#allocation5 + $0x8] sm:$0xff]
    %v63 = vld [vmem:[#allocation5 + $0x10] sm:$0xff]
    %v64 = vld [vmem:[#allocation5 + $0x18] sm:$0xff]
    %vm65 = vcmask 261120
    %v67 = vsel %vm65, %v59, 0
    %v70 = vsel %vm65, %v60, 0
    %72 = vmatprep.subr.mxu0 0.0
    %73 = vmatpush1.msra.mxu0 %v61
    %74 = vmatprep.subr.mxu0 0.0
    %75 = vmatpush1.msra.mxu0 %v62
    %76 = vmatprep.subr.mxu0 0.0
    %77 = vmatpush1.msra.mxu0 %v63
    %78 = vmatprep.subr.mxu0 0.0
    %79 = vmatpush1.msra.mxu0 %v64
    %80 = vmatprep.subr.mxu0 0.0
    %81 = vmatpush1.msra.mxu0 0.0
    %82 = vmatprep.subr.mxu0 0.0
    %83 = vmatpush1.msra.mxu0 0.0
    %84 = vmatprep.subr.mxu0 0.0
    %85 = vmatpush1.msra.mxu0 0.0
    %86 = vmatprep.subr.mxu0 0.0
    %87 = vmatpush1.msra.mxu0 0.0
    %88 = vmatprep.subr.mxu0 0.0
    %89 = vmatpush1.msra.mxu0 0.0
    %90 = vmatprep.subr.mxu0 0.0
    %91 = vmatpush1.msra.mxu0 0.0
    %92 = vmatprep.subr.mxu0 0.0
    %93 = vmatpush1.msra.mxu0 0.0
    %94 = vmatprep.subr.mxu0 0.0
    %95 = vmatpush1.msra.mxu0 0.0
    %96 = vmatprep.subr.mxu0 0.0
    %97 = vmatpush1.msra.mxu0 0.0
    %98 = vmatprep.subr.mxu0 0.0
    %99 = vmatpush1.msra.mxu0 0.0
    %100 = vmatprep.subr.mxu0 0.0
    %101 = vmatpush1.msra.mxu0 0.0
    %102 = vmatprep.subr.mxu0 0.0
    %103 = vmatpush1.msra.mxu0 0.0
    %104 = vmatprep.subr.mxu0 0.0
    %105 = vmatpush1.msra.mxu0 0.0
    %106 = vmatprep.subr.mxu0 0.0
    %107 = vmatpush1.msra.mxu0 0.0
    %108 = vmatprep.subr.mxu0 0.0
    %109 = vmatpush1.msra.mxu0 0.0
    %110 = vmatprep.subr.mxu0 0.0
    %111 = vmatpush1.msra.mxu0 0.0
    %112 = vmatprep.subr.mxu0 0.0
    %113 = vmatpush1.msra.mxu0 0.0
    %114 = vmatprep.subr.mxu0 0.0
    %115 = vmatpush1.msra.mxu0 0.0
    %116 = vmatprep.subr.mxu0 0.0
    %117 = vmatpush1.msra.mxu0 0.0
    %118 = vmatprep.subr.mxu0 0.0
    %119 = vmatpush1.msra.mxu0 0.0
    %120 = vmatprep.subr.mxu0 0.0
    %121 = vmatpush1.msra.mxu0 0.0
    %122 = vmatprep.subr.mxu0 0.0
    %123 = vmatpush1.msra.mxu0 0.0
    %124 = vmatprep.subr.mxu0 0.0
    %125 = vmatpush1.msra.mxu0 0.0
    %126 = vmatprep.subr.mxu0 0.0
    %127 = vmatpush1.msra.mxu0 0.0
    %128 = vmatprep.subr.mxu0 0.0
    %129 = vmatpush1.msra.mxu0 0.0
    %130 = vmatprep.subr.mxu0 0.0
    %131 = vmatpush1.msra.mxu0 0.0
    %132 = vmatprep.subr.mxu0 0.0
    %133 = vmatpush1.msra.mxu0 0.0
    %134 = vmatprep.subr.mxu0 0.0
    %135 = vmatpush1.msra.mxu0 0.0
    %136 = vmatprep.mubr.f32.mxu0 0.0
    %137 = vmatmul.mubr.f32.gmra.mrb[0].mxu0 %v67
    %v138 = vpop.f32.mrb[0].mxu0
    %v139 = vadd.f32 0.0, %v138
    %v140 = vpop.f32.mrb[0].mxu0
    %141 = vmatprep.mubr.f32.mxu0 0.0
    %142 = vmatmul.mubr.f32.gmra.mrb[0].mxu0 %v70
    %v143 = vpop.f32.mrb[0].mxu0
    %v144 = vadd.f32 0.0, %v143
    %v145 = vpop.f32.mrb[0].mxu0
    %146 = vdwg.mxu0
    %149 = vrot.lane.b32.xlu0 %v139, 120
    %v150 = vpop.permute.xlu0 %149
    %151 = vrot.lane.b32.xlu0 %v144, 120
    %v152 = vpop.permute.xlu0 %151
    %153 = vrot.lane.b32.xlu0 %v139, 112
    %v154 = vpop.permute.xlu0 %153
    %155 = vrot.lane.b32.xlu0 %v144, 112
    %v156 = vpop.permute.xlu0 %155
    %157 = vrot.lane.b32.xlu0 %v139, 104
    %v158 = vpop.permute.xlu0 %157
    %159 = vrot.lane.b32.xlu0 %v144, 104
    %v160 = vpop.permute.xlu0 %159
    %v161 = vlaneseq
    %v162 = vshrl.u32 %v161, 7
    %v163 = vlaneseq
    %v164 = vand.u32 %v163, 127
    %vm165 = vcmp.ge.s32.totalorder %v162, %v164
    %v166 = vsel %vm165, 0.0, -1e+30
    %167 = vrot.lane.b32.xlu0 %v139, 96
    %v168 = vpop.permute.xlu0 %167
    %vm169 = vcmask 64512
    %v170 = vsel %vm169, %v139, 0
    %v172 = vsel %vm169, %v168, 0
    %174 = vmatprep.subr.mxu0 0.0
    %175 = vmatpush1.xpose.msra.mxu0 %v172
    %176 = vmatprep.subr.mxu0 0.0
    %177 = vmatpush1.xpose.msra.mxu0 0.0
    %178 = vmatprep.subr.mxu0 0.0
    %179 = vmatpush1.xpose.msra.mxu0 0.0
    %180 = vmatprep.subr.mxu0 0.0
    %181 = vmatpush1.xpose.msra.mxu0 0.0
    %182 = vmatprep.subr.mxu0 0.0
    %183 = vmatpush1.xpose.msra.mxu0 0.0
    %184 = vmatprep.subr.mxu0 0.0
    %185 = vmatpush1.xpose.msra.mxu0 0.0
    %186 = vmatprep.subr.mxu0 0.0
    %187 = vmatpush1.xpose.msra.mxu0 0.0
    %188 = vmatprep.subr.mxu0 0.0
    %189 = vmatpush1.xpose.msra.mxu0 0.0
    %190 = vmatprep.subr.mxu0 0.0
    %191 = vmatpush1.xpose.msra.mxu0 0.0
    %192 = vmatprep.subr.mxu0 0.0
    %193 = vmatpush1.xpose.msra.mxu0 0.0
    %194 = vmatprep.subr.mxu0 0.0
    %195 = vmatpush1.xpose.msra.mxu0 0.0
    %196 = vmatprep.subr.mxu0 0.0
    %197 = vmatpush1.xpose.msra.mxu0 0.0
    %198 = vmatprep.subr.mxu0 0.0
    %199 = vmatpush1.xpose.msra.mxu0 0.0
    %200 = vmatprep.subr.mxu0 0.0
    %201 = vmatpush1.xpose.msra.mxu0 0.0
    %202 = vmatprep.subr.mxu0 0.0
    %203 = vmatpush1.xpose.msra.mxu0 0.0
    %204 = vmatprep.subr.mxu0 0.0
    %205 = vmatpush1.xpose.msra.mxu0 0.0
    %206 = vmatprep.subr.mxu0 0.0
    %207 = vmatpush1.xpose.msra.mxu0 0.0
    %208 = vmatprep.subr.mxu0 0.0
    %209 = vmatpush1.xpose.msra.mxu0 0.0
    %210 = vmatprep.subr.mxu0 0.0
    %211 = vmatpush1.xpose.msra.mxu0 0.0
    %212 = vmatprep.subr.mxu0 0.0
    %213 = vmatpush1.xpose.msra.mxu0 0.0
    %214 = vmatprep.subr.mxu0 0.0
    %215 = vmatpush1.xpose.msra.mxu0 0.0
    %216 = vmatprep.subr.mxu0 0.0
    %217 = vmatpush1.xpose.msra.mxu0 0.0
    %218 = vmatprep.subr.mxu0 0.0
    %219 = vmatpush1.xpose.msra.mxu0 0.0
    %220 = vmatprep.subr.mxu0 0.0
    %221 = vmatpush1.xpose.msra.mxu0 0.0
    %222 = vmatprep.subr.mxu0 0.0
    %223 = vmatpush1.xpose.msra.mxu0 0.0
    %224 = vmatprep.subr.mxu0 0.0
    %225 = vmatpush1.xpose.msra.mxu0 0.0
    %226 = vmatprep.subr.mxu0 0.0
    %227 = vmatpush1.xpose.msra.mxu0 0.0
    %228 = vmatprep.subr.mxu0 0.0
    %229 = vmatpush1.xpose.msra.mxu0 0.0
    %230 = vmatprep.subr.mxu0 0.0
    %231 = vmatpush1.xpose.msra.mxu0 0.0
    %232 = vmatprep.subr.mxu0 0.0
    %233 = vmatpush1.xpose.msra.mxu0 0.0
    %234 = vmatprep.subr.mxu0 0.0
    %235 = vmatpush1.xpose.msra.mxu0 0.0
    %236 = vmatprep.subr.mxu0 0.0
    %237 = vmatpush1.xpose.msra.mxu0 0.0
    %238 = vmatprep.mubr.f32.mxu0 0.0
    %239 = vmatmul.mubr.f32.gmra.mrb[0].mxu0 %v170
    %v240 = vpop.f32.mrb[0].mxu0
    %v241 = vadd.f32 %v166, %v240
    %v242 = vpop.f32.mrb[0].mxu0
    %243 = vdwg.mxu0
    %244 = vrot.lane.b32.xlu0 %v144, 96
    %v245 = vpop.permute.xlu0 %244
    %v246 = vsel %vm169, %v144, 0
    %v248 = vsel %vm169, %v245, 0
    %250 = vmatprep.subr.mxu0 0.0
    %251 = vmatpush1.xpose.msra.mxu0 %v248
    %252 = vmatprep.subr.mxu0 0.0
    %253 = vmatpush1.xpose.msra.mxu0 0.0
    %254 = vmatprep.subr.mxu0 0.0
    %255 = vmatpush1.xpose.msra.mxu0 0.0
    %256 = vmatprep.subr.mxu0 0.0
    %257 = vmatpush1.xpose.msra.mxu0 0.0
    %258 = vmatprep.subr.mxu0 0.0
    %259 = vmatpush1.xpose.msra.mxu0 0.0
    %260 = vmatprep.subr.mxu0 0.0
    %261 = vmatpush1.xpose.msra.mxu0 0.0
    %262 = vmatprep.subr.mxu0 0.0
    %263 = vmatpush1.xpose.msra.mxu0 0.0
    %264 = vmatprep.subr.mxu0 0.0
    %265 = vmatpush1.xpose.msra.mxu0 0.0
    %266 = vmatprep.subr.mxu0 0.0
    %267 = vmatpush1.xpose.msra.mxu0 0.0
    %268 = vmatprep.subr.mxu0 0.0
    %269 = vmatpush1.xpose.msra.mxu0 0.0
    %270 = vmatprep.subr.mxu0 0.0
    %271 = vmatpush1.xpose.msra.mxu0 0.0
    %272 = vmatprep.subr.mxu0 0.0
    %273 = vmatpush1.xpose.msra.mxu0 0.0
    %274 = vmatprep.subr.mxu0 0.0
    %275 = vmatpush1.xpose.msra.mxu0 0.0
    %276 = vmatprep.subr.mxu0 0.0
    %277 = vmatpush1.xpose.msra.mxu0 0.0
    %278 = vmatprep.subr.mxu0 0.0
    %279 = vmatpush1.xpose.msra.mxu0 0.0
    %280 = vmatprep.subr.mxu0 0.0
    %281 = vmatpush1.xpose.msra.mxu0 0.0
    %282 = vmatprep.subr.mxu0 0.0
    %283 = vmatpush1.xpose.msra.mxu0 0.0
    %284 = vmatprep.subr.mxu0 0.0
    %285 = vmatpush1.xpose.msra.mxu0 0.0
    %286 = vmatprep.subr.mxu0 0.0
    %287 = vmatpush1.xpose.msra.mxu0 0.0
    %288 = vmatprep.subr.mxu0 0.0
    %289 = vmatpush1.xpose.msra.mxu0 0.0
    %290 = vmatprep.subr.mxu0 0.0
    %291 = vmatpush1.xpose.msra.mxu0 0.0
    %292 = vmatprep.subr.mxu0 0.0
    %293 = vmatpush1.xpose.msra.mxu0 0.0
    %294 = vmatprep.subr.mxu0 0.0
    %295 = vmatpush1.xpose.msra.mxu0 0.0
    %296 = vmatprep.subr.mxu0 0.0
    %297 = vmatpush1.xpose.msra.mxu0 0.0
    %298 = vmatprep.subr.mxu0 0.0
    %299 = vmatpush1.xpose.msra.mxu0 0.0
    %300 = vmatprep.subr.mxu0 0.0
    %301 = vmatpush1.xpose.msra.mxu0 0.0
    %302 = vmatprep.subr.mxu0 0.0
    %303 = vmatpush1.xpose.msra.mxu0 0.0
    %304 = vmatprep.subr.mxu0 0.0
    %305 = vmatpush1.xpose.msra.mxu0 0.0
    %306 = vmatprep.subr.mxu0 0.0
    %307 = vmatpush1.xpose.msra.mxu0 0.0
    %308 = vmatprep.subr.mxu0 0.0
    %309 = vmatpush1.xpose.msra.mxu0 0.0
    %310 = vmatprep.subr.mxu0 0.0
    %311 = vmatpush1.xpose.msra.mxu0 0.0
    %312 = vmatprep.subr.mxu0 0.0
    %313 = vmatpush1.xpose.msra.mxu0 0.0
    %314 = vmatprep.mubr.f32.mxu0 0.0
    %315 = vmatmul.mubr.f32.gmra.mrb[0].mxu0 %v246
    %v316 = vpop.f32.mrb[0].mxu0
    %v317 = vadd.f32 %v166, %v316
    %v318 = vpop.f32.mrb[0].mxu0
    %319 = vdwg.mxu0
    %320 = vrot.lane.b32.xlu0 %v150, 96
    %v321 = vpop.permute.xlu0 %320
    %v322 = vsel %vm169, %v150, 0
    %v324 = vsel %vm169, %v321, 0
    %326 = vmatprep.subr.mxu0 0.0
    %327 = vmatpush1.xpose.msra.mxu0 %v324
    %328 = vmatprep.subr.mxu0 0.0
    %329 = vmatpush1.xpose.msra.mxu0 0.0
    %330 = vmatprep.subr.mxu0 0.0
    %331 = vmatpush1.xpose.msra.mxu0 0.0
    %332 = vmatprep.subr.mxu0 0.0
    %333 = vmatpush1.xpose.msra.mxu0 0.0
    %334 = vmatprep.subr.mxu0 0.0
    %335 = vmatpush1.xpose.msra.mxu0 0.0
    %336 = vmatprep.subr.mxu0 0.0
    %337 = vmatpush1.xpose.msra.mxu0 0.0
    %338 = vmatprep.subr.mxu0 0.0
    %339 = vmatpush1.xpose.msra.mxu0 0.0
    %340 = vmatprep.subr.mxu0 0.0
    %341 = vmatpush1.xpose.msra.mxu0 0.0
    %342 = vmatprep.subr.mxu0 0.0
    %343 = vmatpush1.xpose.msra.mxu0 0.0
    %344 = vmatprep.subr.mxu0 0.0
    %345 = vmatpush1.xpose.msra.mxu0 0.0
    %346 = vmatprep.subr.mxu0 0.0
    %347 = vmatpush1.xpose.msra.mxu0 0.0
    %348 = vmatprep.subr.mxu0 0.0
    %349 = vmatpush1.xpose.msra.mxu0 0.0
    %350 = vmatprep.subr.mxu0 0.0
    %351 = vmatpush1.xpose.msra.mxu0 0.0
    %352 = vmatprep.subr.mxu0 0.0
    %353 = vmatpush1.xpose.msra.mxu0 0.0
    %354 = vmatprep.subr.mxu0 0.0
    %355 = vmatpush1.xpose.msra.mxu0 0.0
    %356 = vmatprep.subr.mxu0 0.0
    %357 = vmatpush1.xpose.msra.mxu0 0.0
    %358 = vmatprep.subr.mxu0 0.0
    %359 = vmatpush1.xpose.msra.mxu0 0.0
    %360 = vmatprep.subr.mxu0 0.0
    %361 = vmatpush1.xpose.msra.mxu0 0.0
    %362 = vmatprep.subr.mxu0 0.0
    %363 = vmatpush1.xpose.msra.mxu0 0.0
    %364 = vmatprep.subr.mxu0 0.0
    %365 = vmatpush1.xpose.msra.mxu0 0.0
    %366 = vmatprep.subr.mxu0 0.0
    %367 = vmatpush1.xpose.msra.mxu0 0.0
    %368 = vmatprep.subr.mxu0 0.0
    %369 = vmatpush1.xpose.msra.mxu0 0.0
    %370 = vmatprep.subr.mxu0 0.0
    %371 = vmatpush1.xpose.msra.mxu0 0.0
    %372 = vmatprep.subr.mxu0 0.0
    %373 = vmatpush1.xpose.msra.mxu0 0.0
    %374 = vmatprep.subr.mxu0 0.0
    %375 = vmatpush1.xpose.msra.mxu0 0.0
    %376 = vmatprep.subr.mxu0 0.0
    %377 = vmatpush1.xpose.msra.mxu0 0.0
    %378 = vmatprep.subr.mxu0 0.0
    %379 = vmatpush1.xpose.msra.mxu0 0.0
    %380 = vmatprep.subr.mxu0 0.0
    %381 = vmatpush1.xpose.msra.mxu0 0.0
    %382 = vmatprep.subr.mxu0 0.0
    %383 = vmatpush1.xpose.msra.mxu0 0.0
    %384 = vmatprep.subr.mxu0 0.0
    %385 = vmatpush1.xpose.msra.mxu0 0.0
    %386 = vmatprep.subr.mxu0 0.0
    %387 = vmatpush1.xpose.msra.mxu0 0.0
    %388 = vmatprep.subr.mxu0 0.0
    %389 = vmatpush1.xpose.msra.mxu0 0.0
    %390 = vmatprep.mubr.f32.mxu0 0.0
    %391 = vmatmul.mubr.f32.gmra.mrb[0].mxu0 %v322
    %v392 = vpop.f32.mrb[0].mxu0
    %v393 = vadd.f32 %v166, %v392
    %v394 = vpop.f32.mrb[0].mxu0
    %395 = vdwg.mxu0
    %396 = vrot.lane.b32.xlu0 %v152, 96
    %v397 = vpop.permute.xlu0 %396
    %v398 = vsel %vm169, %v152, 0
    %v400 = vsel %vm169, %v397, 0
    %402 = vmatprep.subr.mxu0 0.0
    %403 = vmatpush1.xpose.msra.mxu0 %v400
    %404 = vmatprep.subr.mxu0 0.0
    %405 = vmatpush1.xpose.msra.mxu0 0.0
    %406 = vmatprep.subr.mxu0 0.0
    %407 = vmatpush1.xpose.msra.mxu0 0.0
    %408 = vmatprep.subr.mxu0 0.0
    %409 = vmatpush1.xpose.msra.mxu0 0.0
    %410 = vmatprep.subr.mxu0 0.0
    %411 = vmatpush1.xpose.msra.mxu0 0.0
    %412 = vmatprep.subr.mxu0 0.0
    %413 = vmatpush1.xpose.msra.mxu0 0.0
    %414 = vmatprep.subr.mxu0 0.0
    %415 = vmatpush1.xpose.msra.mxu0 0.0
    %416 = vmatprep.subr.mxu0 0.0
    %417 = vmatpush1.xpose.msra.mxu0 0.0
    %418 = vmatprep.subr.mxu0 0.0
    %419 = vmatpush1.xpose.msra.mxu0 0.0
    %420 = vmatprep.subr.mxu0 0.0
    %421 = vmatpush1.xpose.msra.mxu0 0.0
    %422 = vmatprep.subr.mxu0 0.0
    %423 = vmatpush1.xpose.msra.mxu0 0.0
    %424 = vmatprep.subr.mxu0 0.0
    %425 = vmatpush1.xpose.msra.mxu0 0.0
    %426 = vmatprep.subr.mxu0 0.0
    %427 = vmatpush1.xpose.msra.mxu0 0.0
    %428 = vmatprep.subr.mxu0 0.0
    %429 = vmatpush1.xpose.msra.mxu0 0.0
    %430 = vmatprep.subr.mxu0 0.0
    %431 = vmatpush1.xpose.msra.mxu0 0.0
    %432 = vmatprep.subr.mxu0 0.0
    %433 = vmatpush1.xpose.msra.mxu0 0.0
    %434 = vmatprep.subr.mxu0 0.0
    %435 = vmatpush1.xpose.msra.mxu0 0.0
    %436 = vmatprep.subr.mxu0 0.0
    %437 = vmatpush1.xpose.msra.mxu0 0.0
    %438 = vmatprep.subr.mxu0 0.0
    %439 = vmatpush1.xpose.msra.mxu0 0.0
    %440 = vmatprep.subr.mxu0 0.0
    %441 = vmatpush1.xpose.msra.mxu0 0.0
    %442 = vmatprep.subr.mxu0 0.0
    %443 = vmatpush1.xpose.msra.mxu0 0.0
    %444 = vmatprep.subr.mxu0 0.0
    %445 = vmatpush1.xpose.msra.mxu0 0.0
    %446 = vmatprep.subr.mxu0 0.0
    %447 = vmatpush1.xpose.msra.mxu0 0.0
    %448 = vmatprep.subr.mxu0 0.0
    %449 = vmatpush1.xpose.msra.mxu0 0.0
    %450 = vmatprep.subr.mxu0 0.0
    %451 = vmatpush1.xpose.msra.mxu0 0.0
    %452 = vmatprep.subr.mxu0 0.0
    %453 = vmatpush1.xpose.msra.mxu0 0.0
    %454 = vmatprep.subr.mxu0 0.0
    %455 = vmatpush1.xpose.msra.mxu0 0.0
    %456 = vmatprep.subr.mxu0 0.0
    %457 = vmatpush1.xpose.msra.mxu0 0.0
    %458 = vmatprep.subr.mxu0 0.0
    %459 = vmatpush1.xpose.msra.mxu0 0.0
    %460 = vmatprep.subr.mxu0 0.0
    %461 = vmatpush1.xpose.msra.mxu0 0.0
    %462 = vmatprep.subr.mxu0 0.0
    %463 = vmatpush1.xpose.msra.mxu0 0.0
    %464 = vmatprep.subr.mxu0 0.0
    %465 = vmatpush1.xpose.msra.mxu0 0.0
    %466 = vmatprep.mubr.f32.mxu0 0.0
    %467 = vmatmul.mubr.f32.gmra.mrb[0].mxu0 %v398
    %v468 = vpop.f32.mrb[0].mxu0
    %v469 = vadd.f32 %v166, %v468
    %v470 = vpop.f32.mrb[0].mxu0
    %471 = vdwg.mxu0
    %472 = vrot.lane.b32.xlu0 %v154, 96
    %v473 = vpop.permute.xlu0 %472
    %v474 = vsel %vm169, %v154, 0
    %v476 = vsel %vm169, %v473, 0
    %478 = vmatprep.subr.mxu0 0.0
    %479 = vmatpush1.xpose.msra.mxu0 %v476
    %480 = vmatprep.subr.mxu0 0.0
    %481 = vmatpush1.xpose.msra.mxu0 0.0
    %482 = vmatprep.subr.mxu0 0.0
    %483 = vmatpush1.xpose.msra.mxu0 0.0
    %484 = vmatprep.subr.mxu0 0.0
    %485 = vmatpush1.xpose.msra.mxu0 0.0
    %486 = vmatprep.subr.mxu0 0.0
    %487 = vmatpush1.xpose.msra.mxu0 0.0
    %488 = vmatprep.subr.mxu0 0.0
    %489 = vmatpush1.xpose.msra.mxu0 0.0
    %490 = vmatprep.subr.mxu0 0.0
    %491 = vmatpush1.xpose.msra.mxu0 0.0
    %492 = vmatprep.subr.mxu0 0.0
    %493 = vmatpush1.xpose.msra.mxu0 0.0
    %494 = vmatprep.subr.mxu0 0.0
    %495 = vmatpush1.xpose.msra.mxu0 0.0
    %496 = vmatprep.subr.mxu0 0.0
    %497 = vmatpush1.xpose.msra.mxu0 0.0
    %498 = vmatprep.subr.mxu0 0.0
    %499 = vmatpush1.xpose.msra.mxu0 0.0
    %500 = vmatprep.subr.mxu0 0.0
    %501 = vmatpush1.xpose.msra.mxu0 0.0
    %502 = vmatprep.subr.mxu0 0.0
    %503 = vmatpush1.xpose.msra.mxu0 0.0
    %504 = vmatprep.subr.mxu0 0.0
    %505 = vmatpush1.xpose.msra.mxu0 0.0
    %506 = vmatprep.subr.mxu0 0.0
    %507 = vmatpush1.xpose.msra.mxu0 0.0
    %508 = vmatprep.subr.mxu0 0.0
    %509 = vmatpush1.xpose.msra.mxu0 0.0
    %510 = vmatprep.subr.mxu0 0.0
    %511 = vmatpush1.xpose.msra.mxu0 0.0
    %512 = vmatprep.subr.mxu0 0.0
    %513 = vmatpush1.xpose.msra.mxu0 0.0
    %514 = vmatprep.subr.mxu0 0.0
    %515 = vmatpush1.xpose.msra.mxu0 0.0
    %516 = vmatprep.subr.mxu0 0.0
    %517 = vmatpush1.xpose.msra.mxu0 0.0
    %518 = vmatprep.subr.mxu0 0.0
    %519 = vmatpush1.xpose.msra.mxu0 0.0
    %520 = vmatprep.subr.mxu0 0.0
    %521 = vmatpush1.xpose.msra.mxu0 0.0
    %522 = vmatprep.subr.mxu0 0.0
    %523 = vmatpush1.xpose.msra.mxu0 0.0
    %524 = vmatprep.subr.mxu0 0.0
    %525 = vmatpush1.xpose.msra.mxu0 0.0
    %526 = vmatprep.subr.mxu0 0.0
    %527 = vmatpush1.xpose.msra.mxu0 0.0
    %528 = vmatprep.subr.mxu0 0.0
    %529 = vmatpush1.xpose.msra.mxu0 0.0
    %530 = vmatprep.subr.mxu0 0.0
    %531 = vmatpush1.xpose.msra.mxu0 0.0
    %532 = vmatprep.subr.mxu0 0.0
    %533 = vmatpush1.xpose.msra.mxu0 0.0
    %534 = vmatprep.subr.mxu0 0.0
    %535 = vmatpush1.xpose.msra.mxu0 0.0
    %536 = vmatprep.subr.mxu0 0.0
    %537 = vmatpush1.xpose.msra.mxu0 0.0
    %538 = vmatprep.subr.mxu0 0.0
    %539 = vmatpush1.xpose.msra.mxu0 0.0
    %540 = vmatprep.subr.mxu0 0.0
    %541 = vmatpush1.xpose.msra.mxu0 0.0
    %542 = vmatprep.mubr.f32.mxu0 0.0
    %543 = vmatmul.mubr.f32.gmra.mrb[0].mxu0 %v474
    %v544 = vpop.f32.mrb[0].mxu0
    %v545 = vadd.f32 %v166, %v544
    %v546 = vpop.f32.mrb[0].mxu0
    %547 = vdwg.mxu0
    %548 = vrot.lane.b32.xlu0 %v156, 96
    %v549 = vpop.permute.xlu0 %548
    %v550 = vsel %vm169, %v156, 0
    %v552 = vsel %vm169, %v549, 0
    %554 = vmatprep.subr.mxu0 0.0
    %555 = vmatpush1.xpose.msra.mxu0 %v552
    %556 = vmatprep.subr.mxu0 0.0
    %557 = vmatpush1.xpose.msra.mxu0 0.0
    %558 = vmatprep.subr.mxu0 0.0
    %559 = vmatpush1.xpose.msra.mxu0 0.0
    %560 = vmatprep.subr.mxu0 0.0
    %561 = vmatpush1.xpose.msra.mxu0 0.0
    %562 = vmatprep.subr.mxu0 0.0
    %563 = vmatpush1.xpose.msra.mxu0 0.0
    %564 = vmatprep.subr.mxu0 0.0
    %565 = vmatpush1.xpose.msra.mxu0 0.0
    %566 = vmatprep.subr.mxu0 0.0
    %567 = vmatpush1.xpose.msra.mxu0 0.0
    %568 = vmatprep.subr.mxu0 0.0
    %569 = vmatpush1.xpose.msra.mxu0 0.0
    %570 = vmatprep.subr.mxu0 0.0
    %571 = vmatpush1.xpose.msra.mxu0 0.0
    %572 = vmatprep.subr.mxu0 0.0
    %573 = vmatpush1.xpose.msra.mxu0 0.0
    %574 = vmatprep.subr.mxu0 0.0
    %575 = vmatpush1.xpose.msra.mxu0 0.0
    %576 = vmatprep.subr.mxu0 0.0
    %577 = vmatpush1.xpose.msra.mxu0 0.0
    %578 = vmatprep.subr.mxu0 0.0
    %579 = vmatpush1.xpose.msra.mxu0 0.0
    %580 = vmatprep.subr.mxu0 0.0
    %581 = vmatpush1.xpose.msra.mxu0 0.0
    %582 = vmatprep.subr.mxu0 0.0
    %583 = vmatpush1.xpose.msra.mxu0 0.0
    %584 = vmatprep.subr.mxu0 0.0
    %585 = vmatpush1.xpose.msra.mxu0 0.0
    %586 = vmatprep.subr.mxu0 0.0
    %587 = vmatpush1.xpose.msra.mxu0 0.0
    %588 = vmatprep.subr.mxu0 0.0
    %589 = vmatpush1.xpose.msra.mxu0 0.0
    %590 = vmatprep.subr.mxu0 0.0
    %591 = vmatpush1.xpose.msra.mxu0 0.0
    %592 = vmatprep.subr.mxu0 0.0
    %593 = vmatpush1.xpose.msra.mxu0 0.0
    %594 = vmatprep.subr.mxu0 0.0
    %595 = vmatpush1.xpose.msra.mxu0 0.0
    %596 = vmatprep.subr.mxu0 0.0
    %597 = vmatpush1.xpose.msra.mxu0 0.0
    %598 = vmatprep.subr.mxu0 0.0
    %599 = vmatpush1.xpose.msra.mxu0 0.0
    %600 = vmatprep.subr.mxu0 0.0
    %601 = vmatpush1.xpose.msra.mxu0 0.0
    %602 = vmatprep.subr.mxu0 0.0
    %603 = vmatpush1.xpose.msra.mxu0 0.0
    %604 = vmatprep.subr.mxu0 0.0
    %605 = vmatpush1.xpose.msra.mxu0 0.0
    %606 = vmatprep.subr.mxu0 0.0
    %607 = vmatpush1.xpose.msra.mxu0 0.0
    %608 = vmatprep.subr.mxu0 0.0
    %609 = vmatpush1.xpose.msra.mxu0 0.0
    %610 = vmatprep.subr.mxu0 0.0
    %611 = vmatpush1.xpose.msra.mxu0 0.0
    %612 = vmatprep.subr.mxu0 0.0
    %613 = vmatpush1.xpose.msra.mxu0 0.0
    %614 = vmatprep.subr.mxu0 0.0
    %615 = vmatpush1.xpose.msra.mxu0 0.0
    %616 = vmatprep.subr.mxu0 0.0
    %617 = vmatpush1.xpose.msra.mxu0 0.0
    %618 = vmatprep.mubr.f32.mxu0 0.0
    %619 = vmatmul.mubr.f32.gmra.mrb[0].mxu0 %v550
    %v620 = vpop.f32.mrb[0].mxu0
    %v621 = vadd.f32 %v166, %v620
    %v622 = vpop.f32.mrb[0].mxu0
    %623 = vdwg.mxu0
    %624 = vrot.lane.b32.xlu0 %v158, 96
    %v625 = vpop.permute.xlu0 %624
    %v626 = vsel %vm169, %v158, 0
    %v628 = vsel %vm169, %v625, 0
    %630 = vmatprep.subr.mxu0 0.0
    %631 = vmatpush1.xpose.msra.mxu0 %v628
    %632 = vmatprep.subr.mxu0 0.0
    %633 = vmatpush1.xpose.msra.mxu0 0.0
    %634 = vmatprep.subr.mxu0 0.0
    %635 = vmatpush1.xpose.msra.mxu0 0.0
    %636 = vmatprep.subr.mxu0 0.0
    %637 = vmatpush1.xpose.msra.mxu0 0.0
    %638 = vmatprep.subr.mxu0 0.0
    %639 = vmatpush1.xpose.msra.mxu0 0.0
    %640 = vmatprep.subr.mxu0 0.0
    %641 = vmatpush1.xpose.msra.mxu0 0.0
    %642 = vmatprep.subr.mxu0 0.0
    %643 = vmatpush1.xpose.msra.mxu0 0.0
    %644 = vmatprep.subr.mxu0 0.0
    %645 = vmatpush1.xpose.msra.mxu0 0.0
    %646 = vmatprep.subr.mxu0 0.0
    %647 = vmatpush1.xpose.msra.mxu0 0.0
    %648 = vmatprep.subr.mxu0 0.0
    %649 = vmatpush1.xpose.msra.mxu0 0.0
    %650 = vmatprep.subr.mxu0 0.0
    %651 = vmatpush1.xpose.msra.mxu0 0.0
    %652 = vmatprep.subr.mxu0 0.0
    %653 = vmatpush1.xpose.msra.mxu0 0.0
    %654 = vmatprep.subr.mxu0 0.0
    %655 = vmatpush1.xpose.msra.mxu0 0.0
    %656 = vmatprep.subr.mxu0 0.0
    %657 = vmatpush1.xpose.msra.mxu0 0.0
    %658 = vmatprep.subr.mxu0 0.0
    %659 = vmatpush1.xpose.msra.mxu0 0.0
    %660 = vmatprep.subr.mxu0 0.0
    %661 = vmatpush1.xpose.msra.mxu0 0.0
    %662 = vmatprep.subr.mxu0 0.0
    %663 = vmatpush1.xpose.msra.mxu0 0.0
    %664 = vmatprep.subr.mxu0 0.0
    %665 = vmatpush1.xpose.msra.mxu0 0.0
    %666 = vmatprep.subr.mxu0 0.0
    %667 = vmatpush1.xpose.msra.mxu0 0.0
    %668 = vmatprep.subr.mxu0 0.0
    %669 = vmatpush1.xpose.msra.mxu0 0.0
    %670 = vmatprep.subr.mxu0 0.0
    %671 = vmatpush1.xpose.msra.mxu0 0.0
    %672 = vmatprep.subr.mxu0 0.0
    %673 = vmatpush1.xpose.msra.mxu0 0.0
    %674 = vmatprep.subr.mxu0 0.0
    %675 = vmatpush1.xpose.msra.mxu0 0.0
    %676 = vmatprep.subr.mxu0 0.0
    %677 = vmatpush1.xpose.msra.mxu0 0.0
    %678 = vmatprep.subr.mxu0 0.0
    %679 = vmatpush1.xpose.msra.mxu0 0.0
    %680 = vmatprep.subr.mxu0 0.0
    %681 = vmatpush1.xpose.msra.mxu0 0.0
    %682 = vmatprep.subr.mxu0 0.0
    %683 = vmatpush1.xpose.msra.mxu0 0.0
    %684 = vmatprep.subr.mxu0 0.0
    %685 = vmatpush1.xpose.msra.mxu0 0.0
    %686 = vmatprep.subr.mxu0 0.0
    %687 = vmatpush1.xpose.msra.mxu0 0.0
    %688 = vmatprep.subr.mxu0 0.0
    %689 = vmatpush1.xpose.msra.mxu0 0.0
    %690 = vmatprep.subr.mxu0 0.0
    %691 = vmatpush1.xpose.msra.mxu0 0.0
    %692 = vmatprep.subr.mxu0 0.0
    %693 = vmatpush1.xpose.msra.mxu0 0.0
    %694 = vmatprep.mubr.f32.mxu0 0.0
    %695 = vmatmul.mubr.f32.gmra.mrb[0].mxu0 %v626
    %v696 = vpop.f32.mrb[0].mxu0
    %v697 = vadd.f32 %v166, %v696
    %v698 = vpop.f32.mrb[0].mxu0
    %699 = vdwg.mxu0
    %700 = vrot.lane.b32.xlu0 %v160, 96
    %v701 = vpop.permute.xlu0 %700
    %v702 = vsel %vm169, %v160, 0
    %v704 = vsel %vm169, %v701, 0
    %706 = vmatprep.subr.mxu0 0.0
    %707 = vmatpush1.xpose.msra.mxu0 %v704
    %708 = vmatprep.subr.mxu0 0.0
    %709 = vmatpush1.xpose.msra.mxu0 0.0
    %710 = vmatprep.subr.mxu0 0.0
    %711 = vmatpush1.xpose.msra.mxu0 0.0
    %712 = vmatprep.subr.mxu0 0.0
    %713 = vmatpush1.xpose.msra.mxu0 0.0
    %714 = vmatprep.subr.mxu0 0.0
    %715 = vmatpush1.xpose.msra.mxu0 0.0
    %716 = vmatprep.subr.mxu0 0.0
    %717 = vmatpush1.xpose.msra.mxu0 0.0
    %718 = vmatprep.subr.mxu0 0.0
    %719 = vmatpush1.xpose.msra.mxu0 0.0
    %720 = vmatprep.subr.mxu0 0.0
    %721 = vmatpush1.xpose.msra.mxu0 0.0
    %722 = vmatprep.subr.mxu0 0.0
    %723 = vmatpush1.xpose.msra.mxu0 0.0
    %724 = vmatprep.subr.mxu0 0.0
    %725 = vmatpush1.xpose.msra.mxu0 0.0
    %726 = vmatprep.subr.mxu0 0.0
    %727 = vmatpush1.xpose.msra.mxu0 0.0
    %728 = vmatprep.subr.mxu0 0.0
    %729 = vmatpush1.xpose.msra.mxu0 0.0
    %730 = vmatprep.subr.mxu0 0.0
    %731 = vmatpush1.xpose.msra.mxu0 0.0
    %732 = vmatprep.subr.mxu0 0.0
    %733 = vmatpush1.xpose.msra.mxu0 0.0
    %734 = vmatprep.subr.mxu0 0.0
    %735 = vmatpush1.xpose.msra.mxu0 0.0
    %736 = vmatprep.subr.mxu0 0.0
    %737 = vmatpush1.xpose.msra.mxu0 0.0
    %738 = vmatprep.subr.mxu0 0.0
    %739 = vmatpush1.xpose.msra.mxu0 0.0
    %740 = vmatprep.subr.mxu0 0.0
    %741 = vmatpush1.xpose.msra.mxu0 0.0
    %742 = vmatprep.subr.mxu0 0.0
    %743 = vmatpush1.xpose.msra.mxu0 0.0
    %744 = vmatprep.subr.mxu0 0.0
    %745 = vmatpush1.xpose.msra.mxu0 0.0
    %746 = vmatprep.subr.mxu0 0.0
    %747 = vmatpush1.xpose.msra.mxu0 0.0
    %748 = vmatprep.subr.mxu0 0.0
    %749 = vmatpush1.xpose.msra.mxu0 0.0
    %750 = vmatprep.subr.mxu0 0.0
    %751 = vmatpush1.xpose.msra.mxu0 0.0
    %752 = vmatprep.subr.mxu0 0.0
    %753 = vmatpush1.xpose.msra.mxu0 0.0
    %754 = vmatprep.subr.mxu0 0.0
    %755 = vmatpush1.xpose.msra.mxu0 0.0
    %756 = vmatprep.subr.mxu0 0.0
    %757 = vmatpush1.xpose.msra.mxu0 0.0
    %758 = vmatprep.subr.mxu0 0.0
    %759 = vmatpush1.xpose.msra.mxu0 0.0
    %760 = vmatprep.subr.mxu0 0.0
    %761 = vmatpush1.xpose.msra.mxu0 0.0
    %762 = vmatprep.subr.mxu0 0.0
    %763 = vmatpush1.xpose.msra.mxu0 0.0
    %764 = vmatprep.subr.mxu0 0.0
    %765 = vmatpush1.xpose.msra.mxu0 0.0
    %766 = vmatprep.subr.mxu0 0.0
    %767 = vmatpush1.xpose.msra.mxu0 0.0
    %768 = vmatprep.subr.mxu0 0.0
    %769 = vmatpush1.xpose.msra.mxu0 0.0
    %770 = vmatprep.mubr.f32.mxu0 0.0
    %771 = vmatmul.mubr.f32.gmra.mrb[0].mxu0 %v702
    %v772 = vpop.f32.mrb[0].mxu0
    %v773 = vadd.f32 %v166, %v772
    %v774 = vpop.f32.mrb[0].mxu0
    %775 = vdwg.mxu0
    %v776 = vsel %vm169, %v241, -inf
    %777 = vmax.xlane.f32.xlu0 %v776
    %v778 = vpop.xlane.xlu0 %777
    %v779 = vsel %vm169, %v317, -inf
    %780 = vmax.xlane.f32.xlu0 %v779
    %v781 = vpop.xlane.xlu0 %780
    %v782 = vsel %vm169, %v393, -inf
    %783 = vmax.xlane.f32.xlu0 %v782
    %v784 = vpop.xlane.xlu0 %783
    %v785 = vsel %vm169, %v469, -inf
    %786 = vmax.xlane.f32.xlu0 %v785
    %v787 = vpop.xlane.xlu0 %786
    %v788 = vsel %vm169, %v545, -inf
    %789 = vmax.xlane.f32.xlu0 %v788
    %v790 = vpop.xlane.xlu0 %789
    %v791 = vsel %vm169, %v621, -inf
    %792 = vmax.xlane.f32.xlu0 %v791
    %v793 = vpop.xlane.xlu0 %792
    %v794 = vsel %vm169, %v697, -inf
    %795 = vmax.xlane.f32.xlu0 %v794
    %v796 = vpop.xlane.xlu0 %795
    %v797 = vsel %vm169, %v773, -inf
    %798 = vmax.xlane.f32.xlu0 %v797
    %v799 = vpop.xlane.xlu0 %798
    %v800 = vsub.f32 %v241, %v778
    %v801 = vsub.f32 %v317, %v781
    %v802 = vsub.f32 %v393, %v784
    %v803 = vsub.f32 %v469, %v787
    %v804 = vsub.f32 %v545, %v790
    %v805 = vsub.f32 %v621, %v793
    %v806 = vsub.f32 %v697, %v796
    %v807 = vsub.f32 %v773, %v799
    %v808 = vmul.f32 %v800, 1.442695
    %v809 = vpow.pop %v808
    %v810 = vmul.f32 %v801, 1.442695
    %v811 = vpow.pop %v810
    %v812 = vmul.f32 %v802, 1.442695
    %v813 = vpow.pop %v812
    %v814 = vmul.f32 %v803, 1.442695
    %v815 = vpow.pop %v814
    %v816 = vmul.f32 %v804, 1.442695
    %v817 = vpow.pop %v816
    %v818 = vmul.f32 %v805, 1.442695
    %v819 = vpow.pop %v818
    %v820 = vmul.f32 %v806, 1.442695
    %v821 = vpow.pop %v820
    %v822 = vmul.f32 %v807, 1.442695
    %v823 = vpow.pop %v822
    %v824 = vsel %vm169, %v809, 0.0
    %825 = vadd.xlane.f32.xlu0 %v824
    %v826 = vpop.xlane.xlu0 %825
    %v827 = vsel %vm169, %v811, 0.0
    %828 = vadd.xlane.f32.xlu0 %v827
    %v829 = vpop.xlane.xlu0 %828
    %v830 = vsel %vm169, %v813, 0.0
    %831 = vadd.xlane.f32.xlu0 %v830
    %v832 = vpop.xlane.xlu0 %831
    %v833 = vsel %vm169, %v815, 0.0
    %834 = vadd.xlane.f32.xlu0 %v833
    %v835 = vpop.xlane.xlu0 %834
    %v836 = vsel %vm169, %v817, 0.0
    %837 = vadd.xlane.f32.xlu0 %v836
    %v838 = vpop.xlane.xlu0 %837
    %v839 = vsel %vm169, %v819, 0.0
    %840 = vadd.xlane.f32.xlu0 %v839
    %v841 = vpop.xlane.xlu0 %840
    %v842 = vsel %vm169, %v821, 0.0
    %843 = vadd.xlane.f32.xlu0 %v842
    %v844 = vpop.xlane.xlu0 %843
    %v845 = vsel %vm169, %v823, 0.0
    %846 = vadd.xlane.f32.xlu0 %v845
    %v847 = vpop.xlane.xlu0 %846
    %v848 = vrcp.pop %v826
    %v849 = vrcp.pop %v829
    %v850 = vrcp.pop %v832
    %v851 = vrcp.pop %v835
    %v852 = vrcp.pop %v838
    %v853 = vrcp.pop %v841
    %v854 = vrcp.pop %v844
    %v855 = vrcp.pop %v847
    %v856 = vmul.f32 %v809, %v848
    %v857 = vmul.f32 %v811, %v849
    %v858 = vmul.f32 %v813, %v850
    %v859 = vmul.f32 %v815, %v851
    %v860 = vmul.f32 %v817, %v852
    %v861 = vmul.f32 %v819, %v853
    %v862 = vmul.f32 %v821, %v854
    %v863 = vmul.f32 %v823, %v855
    %864 = vrot.lane.b32.xlu0 %v139, 64
    %v865 = vpop.permute.xlu0 %864
    %v868 = vsel %vm169, %v856, 0
    %870 = vmatprep.subr.mxu0 0.0
    %871 = vmatpush1.msra.mxu0 %v865
    %872 = vmatprep.subr.mxu0 0.0
    %873 = vmatpush1.msra.mxu0 0.0
    %874 = vmatprep.subr.mxu0 0.0
    %875 = vmatpush1.msra.mxu0 0.0
    %876 = vmatprep.subr.mxu0 0.0
    %877 = vmatpush1.msra.mxu0 0.0
    %878 = vmatprep.subr.mxu0 0.0
    %879 = vmatpush1.msra.mxu0 0.0
    %880 = vmatprep.subr.mxu0 0.0
    %881 = vmatpush1.msra.mxu0 0.0
    %882 = vmatprep.subr.mxu0 0.0
    %883 = vmatpush1.msra.mxu0 0.0
    %884 = vmatprep.subr.mxu0 0.0
    %885 = vmatpush1.msra.mxu0 0.0
    %886 = vmatprep.subr.mxu0 0.0
    %887 = vmatpush1.msra.mxu0 0.0
    %888 = vmatprep.subr.mxu0 0.0
    %889 = vmatpush1.msra.mxu0 0.0
    %890 = vmatprep.subr.mxu0 0.0
    %891 = vmatpush1.msra.mxu0 0.0
    %892 = vmatprep.subr.mxu0 0.0
    %893 = vmatpush1.msra.mxu0 0.0
    %894 = vmatprep.subr.mxu0 0.0
    %895 = vmatpush1.msra.mxu0 0.0
    %896 = vmatprep.subr.mxu0 0.0
    %897 = vmatpush1.msra.mxu0 0.0
    %898 = vmatprep.subr.mxu0 0.0
    %899 = vmatpush1.msra.mxu0 0.0
    %900 = vmatprep.subr.mxu0 0.0
    %901 = vmatpush1.msra.mxu0 0.0
    %902 = vmatprep.subr.mxu0 0.0
    %903 = vmatpush1.msra.mxu0 0.0
    %904 = vmatprep.subr.mxu0 0.0
    %905 = vmatpush1.msra.mxu0 0.0
    %906 = vmatprep.subr.mxu0 0.0
    %907 = vmatpush1.msra.mxu0 0.0
    %908 = vmatprep.subr.mxu0 0.0
    %909 = vmatpush1.msra.mxu0 0.0
    %910 = vmatprep.subr.mxu0 0.0
    %911 = vmatpush1.msra.mxu0 0.0
    %912 = vmatprep.subr.mxu0 0.0
    %913 = vmatpush1.msra.mxu0 0.0
    %914 = vmatprep.subr.mxu0 0.0
    %915 = vmatpush1.msra.mxu0 0.0
    %916 = vmatprep.subr.mxu0 0.0
    %917 = vmatpush1.msra.mxu0 0.0
    %918 = vmatprep.subr.mxu0 0.0
    %919 = vmatpush1.msra.mxu0 0.0
    %920 = vmatprep.subr.mxu0 0.0
    %921 = vmatpush1.msra.mxu0 0.0
    %922 = vmatprep.subr.mxu0 0.0
    %923 = vmatpush1.msra.mxu0 0.0
    %924 = vmatprep.subr.mxu0 0.0
    %925 = vmatpush1.msra.mxu0 0.0
    %926 = vmatprep.subr.mxu0 0.0
    %927 = vmatpush1.msra.mxu0 0.0
    %928 = vmatprep.subr.mxu0 0.0
    %929 = vmatpush1.msra.mxu0 0.0
    %930 = vmatprep.subr.mxu0 0.0
    %931 = vmatpush1.msra.mxu0 0.0
    %932 = vmatprep.subr.mxu0 0.0
    %933 = vmatpush1.msra.mxu0 0.0
    %934 = vmatprep.mubr.f32.mxu0 0.0
    %935 = vmatmul.mubr.f32.gmra.mrb[0].mxu0 %v868
    %v936 = vpop.f32.mrb[0].mxu0
    %v937 = vadd.f32 0.0, %v936
    %v938 = vpop.f32.mrb[0].mxu0
    %939 = vdwg.mxu0
    %940 = vrot.lane.b32.xlu0 %v144, 64
    %v941 = vpop.permute.xlu0 %940
    %v944 = vsel %vm169, %v857, 0
    %946 = vmatprep.subr.mxu0 0.0
    %947 = vmatpush1.msra.mxu0 %v941
    %948 = vmatprep.subr.mxu0 0.0
    %949 = vmatpush1.msra.mxu0 0.0
    %950 = vmatprep.subr.mxu0 0.0
    %951 = vmatpush1.msra.mxu0 0.0
    %952 = vmatprep.subr.mxu0 0.0
    %953 = vmatpush1.msra.mxu0 0.0
    %954 = vmatprep.subr.mxu0 0.0
    %955 = vmatpush1.msra.mxu0 0.0
    %956 = vmatprep.subr.mxu0 0.0
    %957 = vmatpush1.msra.mxu0 0.0
    %958 = vmatprep.subr.mxu0 0.0
    %959 = vmatpush1.msra.mxu0 0.0
    %960 = vmatprep.subr.mxu0 0.0
    %961 = vmatpush1.msra.mxu0 0.0
    %962 = vmatprep.subr.mxu0 0.0
    %963 = vmatpush1.msra.mxu0 0.0
    %964 = vmatprep.subr.mxu0 0.0
    %965 = vmatpush1.msra.mxu0 0.0
    %966 = vmatprep.subr.mxu0 0.0
    %967 = vmatpush1.msra.mxu0 0.0
    %968 = vmatprep.subr.mxu0 0.0
    %969 = vmatpush1.msra.mxu0 0.0
    %970 = vmatprep.subr.mxu0 0.0
    %971 = vmatpush1.msra.mxu0 0.0
    %972 = vmatprep.subr.mxu0 0.0
    %973 = vmatpush1.msra.mxu0 0.0
    %974 = vmatprep.subr.mxu0 0.0
    %975 = vmatpush1.msra.mxu0 0.0
    %976 = vmatprep.subr.mxu0 0.0
    %977 = vmatpush1.msra.mxu0 0.0
    %978 = vmatprep.subr.mxu0 0.0
    %979 = vmatpush1.msra.mxu0 0.0
    %980 = vmatprep.subr.mxu0 0.0
    %981 = vmatpush1.msra.mxu0 0.0
    %982 = vmatprep.subr.mxu0 0.0
    %983 = vmatpush1.msra.mxu0 0.0
    %984 = vmatprep.subr.mxu0 0.0
    %985 = vmatpush1.msra.mxu0 0.0
    %986 = vmatprep.subr.mxu0 0.0
    %987 = vmatpush1.msra.mxu0 0.0
    %988 = vmatprep.subr.mxu0 0.0
    %989 = vmatpush1.msra.mxu0 0.0
    %990 = vmatprep.subr.mxu0 0.0
    %991 = vmatpush1.msra.mxu0 0.0
    %992 = vmatprep.subr.mxu0 0.0
    %993 = vmatpush1.msra.mxu0 0.0
    %994 = vmatprep.subr.mxu0 0.0
    %995 = vmatpush1.msra.mxu0 0.0
    %996 = vmatprep.subr.mxu0 0.0
    %997 = vmatpush1.msra.mxu0 0.0
    %998 = vmatprep.subr.mxu0 0.0
    %999 = vmatpush1.msra.mxu0 0.0
    %1000 = vmatprep.subr.mxu0 0.0
    %1001 = vmatpush1.msra.mxu0 0.0
    %1002 = vmatprep.subr.mxu0 0.0
    %1003 = vmatpush1.msra.mxu0 0.0
    %1004 = vmatprep.subr.mxu0 0.0
    %1005 = vmatpush1.msra.mxu0 0.0
    %1006 = vmatprep.subr.mxu0 0.0
    %1007 = vmatpush1.msra.mxu0 0.0
    %1008 = vmatprep.subr.mxu0 0.0
    %1009 = vmatpush1.msra.mxu0 0.0
    %1010 = vmatprep.mubr.f32.mxu0 0.0
    %1011 = vmatmul.mubr.f32.gmra.mrb[0].mxu0 %v944
    %v1012 = vpop.f32.mrb[0].mxu0
    %v1013 = vadd.f32 0.0, %v1012
    %v1014 = vpop.f32.mrb[0].mxu0
    %1015 = vdwg.mxu0
    %1016 = vrot.lane.b32.xlu0 %v150, 64
    %v1017 = vpop.permute.xlu0 %1016
    %v1020 = vsel %vm169, %v858, 0
    %1022 = vmatprep.subr.mxu0 0.0
    %1023 = vmatpush1.msra.mxu0 %v1017
    %1024 = vmatprep.subr.mxu0 0.0
    %1025 = vmatpush1.msra.mxu0 0.0
    %1026 = vmatprep.subr.mxu0 0.0
    %1027 = vmatpush1.msra.mxu0 0.0
    %1028 = vmatprep.subr.mxu0 0.0
    %1029 = vmatpush1.msra.mxu0 0.0
    %1030 = vmatprep.subr.mxu0 0.0
    %1031 = vmatpush1.msra.mxu0 0.0
    %1032 = vmatprep.subr.mxu0 0.0
    %1033 = vmatpush1.msra.mxu0 0.0
    %1034 = vmatprep.subr.mxu0 0.0
    %1035 = vmatpush1.msra.mxu0 0.0
    %1036 = vmatprep.subr.mxu0 0.0
    %1037 = vmatpush1.msra.mxu0 0.0
    %1038 = vmatprep.subr.mxu0 0.0
    %1039 = vmatpush1.msra.mxu0 0.0
    %1040 = vmatprep.subr.mxu0 0.0
    %1041 = vmatpush1.msra.mxu0 0.0
    %1042 = vmatprep.subr.mxu0 0.0
    %1043 = vmatpush1.msra.mxu0 0.0
    %1044 = vmatprep.subr.mxu0 0.0
    %1045 = vmatpush1.msra.mxu0 0.0
    %1046 = vmatprep.subr.mxu0 0.0
    %1047 = vmatpush1.msra.mxu0 0.0
    %1048 = vmatprep.subr.mxu0 0.0
    %1049 = vmatpush1.msra.mxu0 0.0
    %1050 = vmatprep.subr.mxu0 0.0
    %1051 = vmatpush1.msra.mxu0 0.0
    %1052 = vmatprep.subr.mxu0 0.0
    %1053 = vmatpush1.msra.mxu0 0.0
    %1054 = vmatprep.subr.mxu0 0.0
    %1055 = vmatpush1.msra.mxu0 0.0
    %1056 = vmatprep.subr.mxu0 0.0
    %1057 = vmatpush1.msra.mxu0 0.0
    %1058 = vmatprep.subr.mxu0 0.0
    %1059 = vmatpush1.msra.mxu0 0.0
    %1060 = vmatprep.subr.mxu0 0.0
    %1061 = vmatpush1.msra.mxu0 0.0
    %1062 = vmatprep.subr.mxu0 0.0
    %1063 = vmatpush1.msra.mxu0 0.0
    %1064 = vmatprep.subr.mxu0 0.0
    %1065 = vmatpush1.msra.mxu0 0.0
    %1066 = vmatprep.subr.mxu0 0.0
    %1067 = vmatpush1.msra.mxu0 0.0
    %1068 = vmatprep.subr.mxu0 0.0
    %1069 = vmatpush1.msra.mxu0 0.0
    %1070 = vmatprep.subr.mxu0 0.0
    %1071 = vmatpush1.msra.mxu0 0.0
    %1072 = vmatprep.subr.mxu0 0.0
    %1073 = vmatpush1.msra.mxu0 0.0
    %1074 = vmatprep.subr.mxu0 0.0
    %1075 = vmatpush1.msra.mxu0 0.0
    %1076 = vmatprep.subr.mxu0 0.0
    %1077 = vmatpush1.msra.mxu0 0.0
    %1078 = vmatprep.subr.mxu0 0.0
    %1079 = vmatpush1.msra.mxu0 0.0
    %1080 = vmatprep.subr.mxu0 0.0
    %1081 = vmatpush1.msra.mxu0 0.0
    %1082 = vmatprep.subr.mxu0 0.0
    %1083 = vmatpush1.msra.mxu0 0.0
    %1084 = vmatprep.subr.mxu0 0.0
    %1085 = vmatpush1.msra.mxu0 0.0
    %1086 = vmatprep.mubr.f32.mxu0 0.0
    %1087 = vmatmul.mubr.f32.gmra.mrb[0].mxu0 %v1020
    %v1088 = vpop.f32.mrb[0].mxu0
    %v1089 = vadd.f32 0.0, %v1088
    %v1090 = vpop.f32.mrb[0].mxu0
    %1091 = vdwg.mxu0
    %1092 = vrot.lane.b32.xlu0 %v152, 64
    %v1093 = vpop.permute.xlu0 %1092
    %v1096 = vsel %vm169, %v859, 0
    %1098 = vmatprep.subr.mxu0 0.0
    %1099 = vmatpush1.msra.mxu0 %v1093
    %1100 = vmatprep.subr.mxu0 0.0
    %1101 = vmatpush1.msra.mxu0 0.0
    %1102 = vmatprep.subr.mxu0 0.0
    %1103 = vmatpush1.msra.mxu0 0.0
    %1104 = vmatprep.subr.mxu0 0.0
    %1105 = vmatpush1.msra.mxu0 0.0
    %1106 = vmatprep.subr.mxu0 0.0
    %1107 = vmatpush1.msra.mxu0 0.0
    %1108 = vmatprep.subr.mxu0 0.0
    %1109 = vmatpush1.msra.mxu0 0.0
    %1110 = vmatprep.subr.mxu0 0.0
    %1111 = vmatpush1.msra.mxu0 0.0
    %1112 = vmatprep.subr.mxu0 0.0
    %1113 = vmatpush1.msra.mxu0 0.0
    %1114 = vmatprep.subr.mxu0 0.0
    %1115 = vmatpush1.msra.mxu0 0.0
    %1116 = vmatprep.subr.mxu0 0.0
    %1117 = vmatpush1.msra.mxu0 0.0
    %1118 = vmatprep.subr.mxu0 0.0
    %1119 = vmatpush1.msra.mxu0 0.0
    %1120 = vmatprep.subr.mxu0 0.0
    %1121 = vmatpush1.msra.mxu0 0.0
    %1122 = vmatprep.subr.mxu0 0.0
    %1123 = vmatpush1.msra.mxu0 0.0
    %1124 = vmatprep.subr.mxu0 0.0
    %1125 = vmatpush1.msra.mxu0 0.0
    %1126 = vmatprep.subr.mxu0 0.0
    %1127 = vmatpush1.msra.mxu0 0.0
    %1128 = vmatprep.subr.mxu0 0.0
    %1129 = vmatpush1.msra.mxu0 0.0
    %1130 = vmatprep.subr.mxu0 0.0
    %1131 = vmatpush1.msra.mxu0 0.0
    %1132 = vmatprep.subr.mxu0 0.0
    %1133 = vmatpush1.msra.mxu0 0.0
    %1134 = vmatprep.subr.mxu0 0.0
    %1135 = vmatpush1.msra.mxu0 0.0
    %1136 = vmatprep.subr.mxu0 0.0
    %1137 = vmatpush1.msra.mxu0 0.0
    %1138 = vmatprep.subr.mxu0 0.0
    %1139 = vmatpush1.msra.mxu0 0.0
    %1140 = vmatprep.subr.mxu0 0.0
    %1141 = vmatpush1.msra.mxu0 0.0
    %1142 = vmatprep.subr.mxu0 0.0
    %1143 = vmatpush1.msra.mxu0 0.0
    %1144 = vmatprep.subr.mxu0 0.0
    %1145 = vmatpush1.msra.mxu0 0.0
    %1146 = vmatprep.subr.mxu0 0.0
    %1147 = vmatpush1.msra.mxu0 0.0
    %1148 = vmatprep.subr.mxu0 0.0
    %1149 = vmatpush1.msra.mxu0 0.0
    %1150 = vmatprep.subr.mxu0 0.0
    %1151 = vmatpush1.msra.mxu0 0.0
    %1152 = vmatprep.subr.mxu0 0.0
    %1153 = vmatpush1.msra.mxu0 0.0
    %1154 = vmatprep.subr.mxu0 0.0
    %1155 = vmatpush1.msra.mxu0 0.0
    %1156 = vmatprep.subr.mxu0 0.0
    %1157 = vmatpush1.msra.mxu0 0.0
    %1158 = vmatprep.subr.mxu0 0.0
    %1159 = vmatpush1.msra.mxu0 0.0
    %1160 = vmatprep.subr.mxu0 0.0
    %1161 = vmatpush1.msra.mxu0 0.0
    %1162 = vmatprep.mubr.f32.mxu0 0.0
    %1163 = vmatmul.mubr.f32.gmra.mrb[0].mxu0 %v1096
    %v1164 = vpop.f32.mrb[0].mxu0
    %v1165 = vadd.f32 0.0, %v1164
    %v1166 = vpop.f32.mrb[0].mxu0
    %1167 = vdwg.mxu0
    %1168 = vrot.lane.b32.xlu0 %v154, 64
    %v1169 = vpop.permute.xlu0 %1168
    %v1172 = vsel %vm169, %v860, 0
    %1174 = vmatprep.subr.mxu0 0.0
    %1175 = vmatpush1.msra.mxu0 %v1169
    %1176 = vmatprep.subr.mxu0 0.0
    %1177 = vmatpush1.msra.mxu0 0.0
    %1178 = vmatprep.subr.mxu0 0.0
    %1179 = vmatpush1.msra.mxu0 0.0
    %1180 = vmatprep.subr.mxu0 0.0
    %1181 = vmatpush1.msra.mxu0 0.0
    %1182 = vmatprep.subr.mxu0 0.0
    %1183 = vmatpush1.msra.mxu0 0.0
    %1184 = vmatprep.subr.mxu0 0.0
    %1185 = vmatpush1.msra.mxu0 0.0
    %1186 = vmatprep.subr.mxu0 0.0
    %1187 = vmatpush1.msra.mxu0 0.0
    %1188 = vmatprep.subr.mxu0 0.0
    %1189 = vmatpush1.msra.mxu0 0.0
    %1190 = vmatprep.subr.mxu0 0.0
    %1191 = vmatpush1.msra.mxu0 0.0
    %1192 = vmatprep.subr.mxu0 0.0
    %1193 = vmatpush1.msra.mxu0 0.0
    %1194 = vmatprep.subr.mxu0 0.0
    %1195 = vmatpush1.msra.mxu0 0.0
    %1196 = vmatprep.subr.mxu0 0.0
    %1197 = vmatpush1.msra.mxu0 0.0
    %1198 = vmatprep.subr.mxu0 0.0
    %1199 = vmatpush1.msra.mxu0 0.0
    %1200 = vmatprep.subr.mxu0 0.0
    %1201 = vmatpush1.msra.mxu0 0.0
    %1202 = vmatprep.subr.mxu0 0.0
    %1203 = vmatpush1.msra.mxu0 0.0
    %1204 = vmatprep.subr.mxu0 0.0
    %1205 = vmatpush1.msra.mxu0 0.0
    %1206 = vmatprep.subr.mxu0 0.0
    %1207 = vmatpush1.msra.mxu0 0.0
    %1208 = vmatprep.subr.mxu0 0.0
    %1209 = vmatpush1.msra.mxu0 0.0
    %1210 = vmatprep.subr.mxu0 0.0
    %1211 = vmatpush1.msra.mxu0 0.0
    %1212 = vmatprep.subr.mxu0 0.0
    %1213 = vmatpush1.msra.mxu0 0.0
    %1214 = vmatprep.subr.mxu0 0.0
    %1215 = vmatpush1.msra.mxu0 0.0
    %1216 = vmatprep.subr.mxu0 0.0
    %1217 = vmatpush1.msra.mxu0 0.0
    %1218 = vmatprep.subr.mxu0 0.0
    %1219 = vmatpush1.msra.mxu0 0.0
    %1220 = vmatprep.subr.mxu0 0.0
    %1221 = vmatpush1.msra.mxu0 0.0
    %1222 = vmatprep.subr.mxu0 0.0
    %1223 = vmatpush1.msra.mxu0 0.0
    %1224 = vmatprep.subr.mxu0 0.0
    %1225 = vmatpush1.msra.mxu0 0.0
    %1226 = vmatprep.subr.mxu0 0.0
    %1227 = vmatpush1.msra.mxu0 0.0
    %1228 = vmatprep.subr.mxu0 0.0
    %1229 = vmatpush1.msra.mxu0 0.0
    %1230 = vmatprep.subr.mxu0 0.0
    %1231 = vmatpush1.msra.mxu0 0.0
    %1232 = vmatprep.subr.mxu0 0.0
    %1233 = vmatpush1.msra.mxu0 0.0
    %1234 = vmatprep.subr.mxu0 0.0
    %1235 = vmatpush1.msra.mxu0 0.0
    %1236 = vmatprep.subr.mxu0 0.0
    %1237 = vmatpush1.msra.mxu0 0.0
    %1238 = vmatprep.mubr.f32.mxu0 0.0
    %1239 = vmatmul.mubr.f32.gmra.mrb[0].mxu0 %v1172
    %v1240 = vpop.f32.mrb[0].mxu0
    %v1241 = vadd.f32 0.0, %v1240
    %v1242 = vpop.f32.mrb[0].mxu0
    %1243 = vdwg.mxu0
    %1244 = vrot.lane.b32.xlu0 %v156, 64
    %v1245 = vpop.permute.xlu0 %1244
    %v1248 = vsel %vm169, %v861, 0
    %1250 = vmatprep.subr.mxu0 0.0
    %1251 = vmatpush1.msra.mxu0 %v1245
    %1252 = vmatprep.subr.mxu0 0.0
    %1253 = vmatpush1.msra.mxu0 0.0
    %1254 = vmatprep.subr.mxu0 0.0
    %1255 = vmatpush1.msra.mxu0 0.0
    %1256 = vmatprep.subr.mxu0 0.0
    %1257 = vmatpush1.msra.mxu0 0.0
    %1258 = vmatprep.subr.mxu0 0.0
    %1259 = vmatpush1.msra.mxu0 0.0
    %1260 = vmatprep.subr.mxu0 0.0
    %1261 = vmatpush1.msra.mxu0 0.0
    %1262 = vmatprep.subr.mxu0 0.0
    %1263 = vmatpush1.msra.mxu0 0.0
    %1264 = vmatprep.subr.mxu0 0.0
    %1265 = vmatpush1.msra.mxu0 0.0
    %1266 = vmatprep.subr.mxu0 0.0
    %1267 = vmatpush1.msra.mxu0 0.0
    %1268 = vmatprep.subr.mxu0 0.0
    %1269 = vmatpush1.msra.mxu0 0.0
    %1270 = vmatprep.subr.mxu0 0.0
    %1271 = vmatpush1.msra.mxu0 0.0
    %1272 = vmatprep.subr.mxu0 0.0
    %1273 = vmatpush1.msra.mxu0 0.0
    %1274 = vmatprep.subr.mxu0 0.0
    %1275 = vmatpush1.msra.mxu0 0.0
    %1276 = vmatprep.subr.mxu0 0.0
    %1277 = vmatpush1.msra.mxu0 0.0
    %1278 = vmatprep.subr.mxu0 0.0
    %1279 = vmatpush1.msra.mxu0 0.0
    %1280 = vmatprep.subr.mxu0 0.0
    %1281 = vmatpush1.msra.mxu0 0.0
    %1282 = vmatprep.subr.mxu0 0.0
    %1283 = vmatpush1.msra.mxu0 0.0
    %1284 = vmatprep.subr.mxu0 0.0
    %1285 = vmatpush1.msra.mxu0 0.0
    %1286 = vmatprep.subr.mxu0 0.0
    %1287 = vmatpush1.msra.mxu0 0.0
    %1288 = vmatprep.subr.mxu0 0.0
    %1289 = vmatpush1.msra.mxu0 0.0
    %1290 = vmatprep.subr.mxu0 0.0
    %1291 = vmatpush1.msra.mxu0 0.0
    %1292 = vmatprep.subr.mxu0 0.0
    %1293 = vmatpush1.msra.mxu0 0.0
    %1294 = vmatprep.subr.mxu0 0.0
    %1295 = vmatpush1.msra.mxu0 0.0
    %1296 = vmatprep.subr.mxu0 0.0
    %1297 = vmatpush1.msra.mxu0 0.0
    %1298 = vmatprep.subr.mxu0 0.0
    %1299 = vmatpush1.msra.mxu0 0.0
    %1300 = vmatprep.subr.mxu0 0.0
    %1301 = vmatpush1.msra.mxu0 0.0
    %1302 = vmatprep.subr.mxu0 0.0
    %1303 = vmatpush1.msra.mxu0 0.0
    %1304 = vmatprep.subr.mxu0 0.0
    %1305 = vmatpush1.msra.mxu0 0.0
    %1306 = vmatprep.subr.mxu0 0.0
    %1307 = vmatpush1.msra.mxu0 0.0
    %1308 = vmatprep.subr.mxu0 0.0
    %1309 = vmatpush1.msra.mxu0 0.0
    %1310 = vmatprep.subr.mxu0 0.0
    %1311 = vmatpush1.msra.mxu0 0.0
    %1312 = vmatprep.subr.mxu0 0.0
    %1313 = vmatpush1.msra.mxu0 0.0
    %1314 = vmatprep.mubr.f32.mxu0 0.0
    %1315 = vmatmul.mubr.f32.gmra.mrb[0].mxu0 %v1248
    %v1316 = vpop.f32.mrb[0].mxu0
    %v1317 = vadd.f32 0.0, %v1316
    %v1318 = vpop.f32.mrb[0].mxu0
    %1319 = vdwg.mxu0
    %1320 = vrot.lane.b32.xlu0 %v158, 64
    %v1321 = vpop.permute.xlu0 %1320
    %v1324 = vsel %vm169, %v862, 0
    %1326 = vmatprep.subr.mxu0 0.0
    %1327 = vmatpush1.msra.mxu0 %v1321
    %1328 = vmatprep.subr.mxu0 0.0
    %1329 = vmatpush1.msra.mxu0 0.0
    %1330 = vmatprep.subr.mxu0 0.0
    %1331 = vmatpush1.msra.mxu0 0.0
    %1332 = vmatprep.subr.mxu0 0.0
    %1333 = vmatpush1.msra.mxu0 0.0
    %1334 = vmatprep.subr.mxu0 0.0
    %1335 = vmatpush1.msra.mxu0 0.0
    %1336 = vmatprep.subr.mxu0 0.0
    %1337 = vmatpush1.msra.mxu0 0.0
    %1338 = vmatprep.subr.mxu0 0.0
    %1339 = vmatpush1.msra.mxu0 0.0
    %1340 = vmatprep.subr.mxu0 0.0
    %1341 = vmatpush1.msra.mxu0 0.0
    %1342 = vmatprep.subr.mxu0 0.0
    %1343 = vmatpush1.msra.mxu0 0.0
    %1344 = vmatprep.subr.mxu0 0.0
    %1345 = vmatpush1.msra.mxu0 0.0
    %1346 = vmatprep.subr.mxu0 0.0
    %1347 = vmatpush1.msra.mxu0 0.0
    %1348 = vmatprep.subr.mxu0 0.0
    %1349 = vmatpush1.msra.mxu0 0.0
    %1350 = vmatprep.subr.mxu0 0.0
    %1351 = vmatpush1.msra.mxu0 0.0
    %1352 = vmatprep.subr.mxu0 0.0
    %1353 = vmatpush1.msra.mxu0 0.0
    %1354 = vmatprep.subr.mxu0 0.0
    %1355 = vmatpush1.msra.mxu0 0.0
    %1356 = vmatprep.subr.mxu0 0.0
    %1357 = vmatpush1.msra.mxu0 0.0
    %1358 = vmatprep.subr.mxu0 0.0
    %1359 = vmatpush1.msra.mxu0 0.0
    %1360 = vmatprep.subr.mxu0 0.0
    %1361 = vmatpush1.msra.mxu0 0.0
    %1362 = vmatprep.subr.mxu0 0.0
    %1363 = vmatpush1.msra.mxu0 0.0
    %1364 = vmatprep.subr.mxu0 0.0
    %1365 = vmatpush1.msra.mxu0 0.0
    %1366 = vmatprep.subr.mxu0 0.0
    %1367 = vmatpush1.msra.mxu0 0.0
    %1368 = vmatprep.subr.mxu0 0.0
    %1369 = vmatpush1.msra.mxu0 0.0
    %1370 = vmatprep.subr.mxu0 0.0
    %1371 = vmatpush1.msra.mxu0 0.0
    %1372 = vmatprep.subr.mxu0 0.0
    %1373 = vmatpush1.msra.mxu0 0.0
    %1374 = vmatprep.subr.mxu0 0.0
    %1375 = vmatpush1.msra.mxu0 0.0
    %1376 = vmatprep.subr.mxu0 0.0
    %1377 = vmatpush1.msra.mxu0 0.0
    %1378 = vmatprep.subr.mxu0 0.0
    %1379 = vmatpush1.msra.mxu0 0.0
    %1380 = vmatprep.subr.mxu0 0.0
    %1381 = vmatpush1.msra.mxu0 0.0
    %1382 = vmatprep.subr.mxu0 0.0
    %1383 = vmatpush1.msra.mxu0 0.0
    %1384 = vmatprep.subr.mxu0 0.0
    %1385 = vmatpush1.msra.mxu0 0.0
    %1386 = vmatprep.subr.mxu0 0.0
    %1387 = vmatpush1.msra.mxu0 0.0
    %1388 = vmatprep.subr.mxu0 0.0
    %1389 = vmatpush1.msra.mxu0 0.0
    %1390 = vmatprep.mubr.f32.mxu0 0.0
    %1391 = vmatmul.mubr.f32.gmra.mrb[0].mxu0 %v1324
    %v1392 = vpop.f32.mrb[0].mxu0
    %v1393 = vadd.f32 0.0, %v1392
    %v1394 = vpop.f32.mrb[0].mxu0
    %1395 = vdwg.mxu0
    %1396 = vrot.lane.b32.xlu0 %v160, 64
    %v1397 = vpop.permute.xlu0 %1396
    %v1400 = vsel %vm169, %v863, 0
    %1402 = vmatprep.subr.mxu0 0.0
    %1403 = vmatpush1.msra.mxu0 %v1397
    %1404 = vmatprep.subr.mxu0 0.0
    %1405 = vmatpush1.msra.mxu0 0.0
    %1406 = vmatprep.subr.mxu0 0.0
    %1407 = vmatpush1.msra.mxu0 0.0
    %1408 = vmatprep.subr.mxu0 0.0
    %1409 = vmatpush1.msra.mxu0 0.0
    %1410 = vmatprep.subr.mxu0 0.0
    %1411 = vmatpush1.msra.mxu0 0.0
    %1412 = vmatprep.subr.mxu0 0.0
    %1413 = vmatpush1.msra.mxu0 0.0
    %1414 = vmatprep.subr.mxu0 0.0
    %1415 = vmatpush1.msra.mxu0 0.0
    %1416 = vmatprep.subr.mxu0 0.0
    %1417 = vmatpush1.msra.mxu0 0.0
    %1418 = vmatprep.subr.mxu0 0.0
    %1419 = vmatpush1.msra.mxu0 0.0
    %1420 = vmatprep.subr.mxu0 0.0
    %1421 = vmatpush1.msra.mxu0 0.0
    %1422 = vmatprep.subr.mxu0 0.0
    %1423 = vmatpush1.msra.mxu0 0.0
    %1424 = vmatprep.subr.mxu0 0.0
    %1425 = vmatpush1.msra.mxu0 0.0
    %1426 = vmatprep.subr.mxu0 0.0
    %1427 = vmatpush1.msra.mxu0 0.0
    %1428 = vmatprep.subr.mxu0 0.0
    %1429 = vmatpush1.msra.mxu0 0.0
    %1430 = vmatprep.subr.mxu0 0.0
    %1431 = vmatpush1.msra.mxu0 0.0
    %1432 = vmatprep.subr.mxu0 0.0
    %1433 = vmatpush1.msra.mxu0 0.0
    %1434 = vmatprep.subr.mxu0 0.0
    %1435 = vmatpush1.msra.mxu0 0.0
    %1436 = vmatprep.subr.mxu0 0.0
    %1437 = vmatpush1.msra.mxu0 0.0
    %1438 = vmatprep.subr.mxu0 0.0
    %1439 = vmatpush1.msra.mxu0 0.0
    %1440 = vmatprep.subr.mxu0 0.0
    %1441 = vmatpush1.msra.mxu0 0.0
    %1442 = vmatprep.subr.mxu0 0.0
    %1443 = vmatpush1.msra.mxu0 0.0
    %1444 = vmatprep.subr.mxu0 0.0
    %1445 = vmatpush1.msra.mxu0 0.0
    %1446 = vmatprep.subr.mxu0 0.0
    %1447 = vmatpush1.msra.mxu0 0.0
    %1448 = vmatprep.subr.mxu0 0.0
    %1449 = vmatpush1.msra.mxu0 0.0
    %1450 = vmatprep.subr.mxu0 0.0
    %1451 = vmatpush1.msra.mxu0 0.0
    %1452 = vmatprep.subr.mxu0 0.0
    %1453 = vmatpush1.msra.mxu0 0.0
    %1454 = vmatprep.subr.mxu0 0.0
    %1455 = vmatpush1.msra.mxu0 0.0
    %1456 = vmatprep.subr.mxu0 0.0
    %1457 = vmatpush1.msra.mxu0 0.0
    %1458 = vmatprep.subr.mxu0 0.0
    %1459 = vmatpush1.msra.mxu0 0.0
    %1460 = vmatprep.subr.mxu0 0.0
    %1461 = vmatpush1.msra.mxu0 0.0
    %1462 = vmatprep.subr.mxu0 0.0
    %1463 = vmatpush1.msra.mxu0 0.0
    %1464 = vmatprep.subr.mxu0 0.0
    %1465 = vmatpush1.msra.mxu0 0.0
    %1466 = vmatprep.mubr.f32.mxu0 0.0
    %1467 = vmatmul.mubr.f32.gmra.mrb[0].mxu0 %v1400
    %v1468 = vpop.f32.mrb[0].mxu0
    %v1469 = vadd.f32 0.0, %v1468
    %v1470 = vpop.f32.mrb[0].mxu0
    %1471 = vdwg.mxu0
    %1474 = vrot.lane.b32.xlu0 %v1089, 8
    %v1475 = vpop.permute.xlu0 %1474
    %1476 = vrot.lane.b32.xlu0 %v1165, 8
    %v1477 = vpop.permute.xlu0 %1476
    %1482 = vrot.lane.b32.xlu0 %v1241, 16
    %v1483 = vpop.permute.xlu0 %1482
    %1484 = vrot.lane.b32.xlu0 %v1317, 16
    %v1485 = vpop.permute.xlu0 %1484
    %1490 = vrot.lane.b32.xlu0 %v1393, 24
    %v1491 = vpop.permute.xlu0 %1490
    %1492 = vrot.lane.b32.xlu0 %v1469, 24
    %v1493 = vpop.permute.xlu0 %1492
    %v1496 = vsel %vm169, %v937, %v1475
    %v1497 = vsel %vm169, %v1013, %v1477
    %vm1498 = vcmask 130048
    %v1499 = vsel %vm1498, %v1496, %v1483
    %v1500 = vsel %vm1498, %v1497, %v1485
    %vm1501 = vcmask 195584
    %v1502 = vsel %vm1501, %v1499, %v1491
    %v1503 = vsel %vm1501, %v1500, %v1493
    %v1504 = vld [vmem:[#allocation7] sm:$0xff]
    %v1505 = vld [vmem:[#allocation7 + $0x8] sm:$0xff]
    %v1506 = vld [vmem:[#allocation7 + $0x10] sm:$0xff]
    %v1507 = vld [vmem:[#allocation7 + $0x18] sm:$0xff]
    %v1508 = vld [vmem:[%s3] sm:$0x1]
    %v1510 = vlaneseq
    %v1511 = vshrl.u32 %v1510, 7
    %v1512 = vsub.s32 0, %v1511
    %v1513 = vrot.slane %v1508, %v1512
    %v1516 = vsel %vm65, %v1502, 0
    %v1519 = vsel %vm65, %v1503, 0
    %1521 = vmatprep.subr.mxu0 0.0
    %1522 = vmatpush1.msra.mxu0 %v1504
    %1523 = vmatprep.subr.mxu0 0.0
    %1524 = vmatpush1.msra.mxu0 %v1505
    %1525 = vmatprep.subr.mxu0 0.0
    %1526 = vmatpush1.msra.mxu0 %v1506
    %1527 = vmatprep.subr.mxu0 0.0
    %1528 = vmatpush1.msra.mxu0 %v1507
    %1529 = vmatprep.subr.mxu0 0.0
    %1530 = vmatpush1.msra.mxu0 0.0
    %1531 = vmatprep.subr.mxu0 0.0
    %1532 = vmatpush1.msra.mxu0 0.0
    %1533 = vmatprep.subr.mxu0 0.0
    %1534 = vmatpush1.msra.mxu0 0.0
    %1535 = vmatprep.subr.mxu0 0.0
    %1536 = vmatpush1.msra.mxu0 0.0
    %1537 = vmatprep.subr.mxu0 0.0
    %1538 = vmatpush1.msra.mxu0 0.0
    %1539 = vmatprep.subr.mxu0 0.0
    %1540 = vmatpush1.msra.mxu0 0.0
    %1541 = vmatprep.subr.mxu0 0.0
    %1542 = vmatpush1.msra.mxu0 0.0
    %1543 = vmatprep.subr.mxu0 0.0
    %1544 = vmatpush1.msra.mxu0 0.0
    %1545 = vmatprep.subr.mxu0 0.0
    %1546 = vmatpush1.msra.mxu0 0.0
    %1547 = vmatprep.subr.mxu0 0.0
    %1548 = vmatpush1.msra.mxu0 0.0
    %1549 = vmatprep.subr.mxu0 0.0
    %1550 = vmatpush1.msra.mxu0 0.0
    %1551 = vmatprep.subr.mxu0 0.0
    %1552 = vmatpush1.msra.mxu0 0.0
    %1553 = vmatprep.subr.mxu0 0.0
    %1554 = vmatpush1.msra.mxu0 0.0
    %1555 = vmatprep.subr.mxu0 0.0
    %1556 = vmatpush1.msra.mxu0 0.0
    %1557 = vmatprep.subr.mxu0 0.0
    %1558 = vmatpush1.msra.mxu0 0.0
    %1559 = vmatprep.subr.mxu0 0.0
    %1560 = vmatpush1.msra.mxu0 0.0
    %1561 = vmatprep.subr.mxu0 0.0
    %1562 = vmatpush1.msra.mxu0 0.0
    %1563 = vmatprep.subr.mxu0 0.0
    %1564 = vmatpush1.msra.mxu0 0.0
    %1565 = vmatprep.subr.mxu0 0.0
    %1566 = vmatpush1.msra.mxu0 0.0
    %1567 = vmatprep.subr.mxu0 0.0
    %1568 = vmatpush1.msra.mxu0 0.0
    %1569 = vmatprep.subr.mxu0 0.0
    %1570 = vmatpush1.msra.mxu0 0.0
    %1571 = vmatprep.subr.mxu0 0.0
    %1572 = vmatpush1.msra.mxu0 0.0
    %1573 = vmatprep.subr.mxu0 0.0
    %1574 = vmatpush1.msra.mxu0 0.0
    %1575 = vmatprep.subr.mxu0 0.0
    %1576 = vmatpush1.msra.mxu0 0.0
    %1577 = vmatprep.subr.mxu0 0.0
    %1578 = vmatpush1.msra.mxu0 0.0
    %1579 = vmatprep.subr.mxu0 0.0
    %1580 = vmatpush1.msra.mxu0 0.0
    %1581 = vmatprep.subr.mxu0 0.0
    %1582 = vmatpush1.msra.mxu0 0.0
    %1583 = vmatprep.subr.mxu0 0.0
    %1584 = vmatpush1.msra.mxu0 0.0
    %1585 = vmatprep.mubr.f32.mxu0 0.0
    %1586 = vmatmul.mubr.f32.gmra.mrb[0].mxu0 %v1516
    %v1587 = vpop.f32.mrb[0].mxu0
    %v1588 = vadd.f32 %v1513, %v1587
    %v1589 = vpop.f32.mrb[0].mxu0
    %1590 = vmatprep.mubr.f32.mxu0 0.0
    %1591 = vmatmul.mubr.f32.gmra.mrb[0].mxu0 %v1519
    %v1592 = vpop.f32.mrb[0].mxu0
    %v1593 = vadd.f32 %v1513, %v1592
    %v1594 = vpop.f32.mrb[0].mxu0
    %1595 = vdwg.mxu0
    %1596 = vst.msk [vmem:[#allocation8] sm:$0xff] %vm65, %v1588
    %1597 = vst.msk [vmem:[#allocation8 + $0x8] sm:$0xff] %vm65, %v1593
    // Predicated region
    $region30: #{tpu_custom_call.1} parent=1 // pred_check
      _
    $region31: #{tpu_custom_call.1} parent=1 // pred_check_branch
      %1599 = sbr.rel (0) target = $region33
    $region32: #{tpu_custom_call.1} parent=1 // pred_region
      %s1601 = ssub.s32 256, 256
      %1602 = vsyncadd [#allocation4], %s1601
      %s1603 = sshll.u32 [#allocation8], 4
      %s1604 = int_to_ptr.vmem [resolvable:$true] %s1603
      %1609 = dma.vmem_to_hbm [thread:$0]  %s1604, 256, %s4, [#allocation4], 128, 128, 8
    $region33: #{tpu_custom_call.1} parent=1 // pred_fallthru
      _
    // Predicated region
    $region34: #{tpu_custom_call.1} parent=1 // pred_check
      _
    $region35: #{tpu_custom_call.1} parent=1 // pred_check_branch
      %1611 = sbr.rel (0) target = $region37
    $region36: #{tpu_custom_call.1} parent=1 // pred_region
      %1612 = dma.done [#allocation4], 256
    $region37: #{tpu_custom_call.1} parent=1 // pred_fallthru
      _
    %1613 = vsyncpa [#allocation3], 1
    %1614 = vsyncpa [#allocation6], 1
    %1615 = vsyncpa [#allocation4], 1

</llo_original>
